<compile_context>
chip_gen: v5e
topology: v5e:2x2
jax: 0.10.0
libtpu: 0.0.40
codegen_flags: <defaults>
</compile_context>

<pallas_src>
import functools

import jax
import jax.numpy as jnp
from jax.experimental import pallas as pl
from jax.experimental.pallas import tpu as pltpu

LN_EPS = 1e-5  # torch.nn.LayerNorm default


def _layernorm(t, g, b):
    mu = jnp.mean(t, axis=-1, keepdims=True)
    var = jnp.mean(jnp.square(t - mu), axis=-1, keepdims=True)
    return (t - mu) * jax.lax.rsqrt(var + LN_EPS) * g + b


def _erf_approx(x):
    # Abramowitz & Stegun 7.1.26, |error| <= 1.5e-7. Used in-kernel so the exact
    # (erf) GELU path is guaranteed to lower on Mosaic (no lax.erf dependency).
    p = 0.3275911
    a1, a2, a3, a4, a5 = (0.254829592, -0.284496736, 1.421413741,
                          -1.453152027, 1.061405429)
    ax = jnp.abs(x)
    t = 1.0 / (1.0 + p * ax)
    poly = ((((a5 * t + a4) * t + a3) * t + a2) * t + a1) * t
    y = 1.0 - poly * jnp.exp(-ax * ax)
    return jnp.where(x < 0.0, -y, y)


def _gelu_exact(x):
    # matches torch.nn.GELU() default (erf based)
    return 0.5 * x * (1.0 + _erf_approx(x * (2.0 ** -0.5)))


def _encoder_kernel(x_ref, wa, ba, pos, ln1_g, ln1_b, wqkv, wo, bo,
                    ln2_g, ln2_b, w1, b1, w2, b2, o_ref, *,
                    heads, dim_head, scale):
    X = x_ref[0]                                   # (C, N) lane-dense, N = H*W

    # ---- tokenizer: 1x1 conv -> spatial softmax -> weighted feature sum ----
    logits = jnp.dot(wa[...], X, preferred_element_type=jnp.float32) + ba[...]   # (L, N)
    logits = logits - jnp.max(logits, axis=-1, keepdims=True)
    e = jnp.exp(logits)
    den = jnp.sum(e, axis=-1, keepdims=True)                                     # (L, 1)
    # softmax divide fused after aggregation: softmax(A) @ X^T == (e @ X^T) / den
    num = jax.lax.dot_general(e, X, (((1,), (1,)), ((), ())),
                              preferred_element_type=jnp.float32)                # (L, C)
    t = num / den + pos[...]                       # tokens + pos_embedding  (L, C)

    L, C = t.shape
    inner = heads * dim_head

    # ---- Residual(PreNorm(Attention)) ----
    xn = _layernorm(t, ln1_g[...], ln1_b[...])
    qkv = jnp.dot(xn, wqkv[...], preferred_element_type=jnp.float32)             # (L, 3*inner)
    q = qkv[:, :inner]
    k = qkv[:, inner:2 * inner]
    v = qkv[:, 2 * inner:]
    wo_all = wo[...]                                                             # (inner, C)

    acc = jnp.zeros((L, C), jnp.float32)
    for h in range(heads):      # L == token_len (4) -> per-head work is tiny
        sl = slice(h * dim_head, (h + 1) * dim_head)
        qh, kh, vh = q[:, sl], k[:, sl], v[:, sl]                                # (L, dh)
        dots = jax.lax.dot_general(qh, kh, (((1,), (1,)), ((), ())),
                                   preferred_element_type=jnp.float32) * scale  # (L, L)
        dots = dots - jnp.max(dots, axis=-1, keepdims=True)
        eh = jnp.exp(dots)
        dh_den = jnp.sum(eh, axis=-1, keepdims=True)
        # softmax divide fused into the per-head output; project into C and
        # accumulate -> no lane-interleaving concatenate of head outputs.
        out_h = jnp.dot(eh, vh, preferred_element_type=jnp.float32) / dh_den     # (L, dh)
        acc = acc + jnp.dot(out_h, wo_all[sl, :],
                            preferred_element_type=jnp.float32)
    x1 = t + acc + bo[...]

    # ---- Residual(PreNorm(FeedForward)) ----
    xn2 = _layernorm(x1, ln2_g[...], ln2_b[...])
    hdn = _gelu_exact(jnp.dot(xn2, w1[...], preferred_element_type=jnp.float32)
                      + b1[...])
    y = jnp.dot(hdn, w2[...], preferred_element_type=jnp.float32) + b2[...]

    o_ref[0] = (x1 + y).astype(o_ref.dtype)


_WEIGHT_KEYS = ('wa', 'ba', 'pos', 'ln1_g', 'ln1_b', 'wqkv', 'wo', 'bo',
                'ln2_g', 'ln2_b', 'w1', 'b1', 'w2', 'b2')


def _const_spec(arr):
    zeros = (0,) * arr.ndim
    return pl.BlockSpec(arr.shape, lambda b, _z=zeros: _z)


def token_encoder_apply(x, params):
    B, C, Hs, Ws = x.shape
    N = Hs * Ws
    L = params['wa'].shape[0]
    heads = params['heads']
    dim_head = params['dim_head']

    # 'b c h w -> b c (h w)' -- contiguous reshape, no transpose / extra HBM pass
    x_flat = x.reshape(B, C, N)
    weights = [params[k] for k in _WEIGHT_KEYS]

    kernel = functools.partial(_encoder_kernel, heads=heads, dim_head=dim_head,
                               scale=float(C) ** -0.5)   # BIT Attention: dim ** -0.5

    return pl.pallas_call(
        kernel,
        out_shape=jax.ShapeDtypeStruct((B, L, C), jnp.float32),
        grid_spec=pltpu.PrefetchScalarGridSpec(
            num_scalar_prefetch=0,
            grid=(B,),
            in_specs=[pl.BlockSpec((1, C, N), lambda b: (b, 0, 0))]
                     + [_const_spec(w) for w in weights],
            out_specs=pl.BlockSpec((1, L, C), lambda b: (b, 0, 0)),
        ),
        compiler_params=pltpu.CompilerParams(
            dimension_semantics=("parallel",)),   # one batch element per TC on v7x
    )(x_flat, *weights)


def token_encoder_ref(x, p):
    """Pure-JAX reference of the same forward pass (for verification)."""
    B, C, Hs, Ws = x.shape
    N = Hs * Ws
    L = p['wa'].shape[0]
    heads, dh = p['heads'], p['dim_head']
    inner = heads * dh

    xf = x.reshape(B, C, N)
    sa = jnp.einsum('lc,bcn->bln', p['wa'], xf) + p['ba'].reshape(1, L, 1)
    sa = jax.nn.softmax(sa, axis=-1)
    t = jnp.einsum('bln,bcn->blc', sa, xf) + p['pos'][None]

    xn = _layernorm(t, p['ln1_g'], p['ln1_b'])
    qkv = xn @ p['wqkv']
    q = qkv[..., :inner].reshape(B, L, heads, dh).transpose(0, 2, 1, 3)
    k = qkv[..., inner:2 * inner].reshape(B, L, heads, dh).transpose(0, 2, 1, 3)
    v = qkv[..., 2 * inner:].reshape(B, L, heads, dh).transpose(0, 2, 1, 3)
    dots = jnp.einsum('bhid,bhjd->bhij', q, k) * (float(C) ** -0.5)
    attn = jax.nn.softmax(dots, axis=-1)
    outh = jnp.einsum('bhij,bhjd->bhid', attn, v)
    outh = outh.transpose(0, 2, 1, 3).reshape(B, L, inner)
    x1 = t + outh @ p['wo'] + p['bo']

    xn2 = _layernorm(x1, p['ln2_g'], p['ln2_b'])
    h = xn2 @ p['w1'] + p['b1']
    h = 0.5 * h * (1.0 + jax.scipy.special.erf(h * (2.0 ** -0.5)))   # exact GELU
    y = h @ p['w2'] + p['b2']
    return x1 + y


def init_params(key, in_chan=64, token_len=4, heads=8, dim_head=64, mlp_dim=64):
    inner = heads * dim_head
    ks = jax.random.split(key, 10)
    s = 0.05
    f32 = jnp.float32
    return {
        'heads': heads,
        'dim_head': dim_head,
        # conv_a: nn.Conv2d(in_chan, token_len, 1) -> weight (L, C, 1, 1) flattened, bias (L, 1)
        'wa': s * jax.random.normal(ks[0], (token_len, in_chan), f32),
        'ba': s * jax.random.normal(ks[1], (token_len, 1), f32),
        # pos_embedding: (1, token_len, in_chan) stored as (L, C)
        'pos': 0.5 * jax.random.normal(ks[2], (token_len, in_chan), f32),
        # PreNorm LayerNorms (torch default init: weight=1, bias=0)
        'ln1_g': jnp.ones((1, in_chan), f32),
        'ln1_b': jnp.zeros((1, in_chan), f32),
        'ln2_g': jnp.ones((1, in_chan), f32),
        'ln2_b': jnp.zeros((1, in_chan), f32),
        # Attention.to_qkv: Linear(in_chan, 3*inner, bias=False), stored (in, out)
        'wqkv': s * jax.random.normal(ks[3], (in_chan, 3 * inner), f32),
        # Attention.to_out: Linear(inner, in_chan)
        'wo': s * jax.random.normal(ks[4], (inner, in_chan), f32),
        'bo': s * jax.random.normal(ks[5], (1, in_chan), f32),
        # FeedForward: Linear(in_chan, mlp_dim), GELU, Linear(mlp_dim, in_chan)
        'w1': s * jax.random.normal(ks[6], (in_chan, mlp_dim), f32),
        'b1': s * jax.random.normal(ks[7], (1, mlp_dim), f32),
        'w2': s * jax.random.normal(ks[8], (mlp_dim, in_chan), f32),
        'b2': s * jax.random.normal(ks[9], (1, in_chan), f32),
    }


if __name__ == "__main__":
    # module defaults: in_chan=64, token_len=4, heads=8, dim_head=64, mlp_dim=64
    in_chan, token_len, heads, dim_head, mlp_dim = 64, 4, 8, 64, 64
    B, Hs, Ws = 2, 16, 16

    kp, kx = jax.random.split(jax.random.PRNGKey(0))
    params = init_params(kp, in_chan, token_len, heads, dim_head, mlp_dim)
    x = jax.random.normal(kx, (B, in_chan, Hs, Ws), jnp.float32)

    out = jax.block_until_ready(token_encoder_apply(x, params))
    ref = token_encoder_ref(x, params)

    assert out.shape == (B, token_len, in_chan), out.shape
    max_err = float(jnp.max(jnp.abs(out - ref)))
    assert jnp.allclose(out, ref, rtol=2e-3, atol=2e-3), max_err
    print("KERNEL_OK")
</pallas_src>

<mosaic_0001>
module attributes {stable_mosaic.version = 11 : i64} {
  func.func @_encoder_kernel(%arg0: i32, %arg1: memref<1x64x256xf32, #tpu.memory_space<vmem>>, %arg2: memref<4x64xf32, #tpu.memory_space<vmem>>, %arg3: memref<4x1xf32, #tpu.memory_space<vmem>>, %arg4: memref<4x64xf32, #tpu.memory_space<vmem>>, %arg5: memref<1x64xf32, #tpu.memory_space<vmem>>, %arg6: memref<1x64xf32, #tpu.memory_space<vmem>>, %arg7: memref<64x1536xf32, #tpu.memory_space<vmem>>, %arg8: memref<512x64xf32, #tpu.memory_space<vmem>>, %arg9: memref<1x64xf32, #tpu.memory_space<vmem>>, %arg10: memref<1x64xf32, #tpu.memory_space<vmem>>, %arg11: memref<1x64xf32, #tpu.memory_space<vmem>>, %arg12: memref<64x64xf32, #tpu.memory_space<vmem>>, %arg13: memref<1x64xf32, #tpu.memory_space<vmem>>, %arg14: memref<64x64xf32, #tpu.memory_space<vmem>>, %arg15: memref<1x64xf32, #tpu.memory_space<vmem>>, %arg16: memref<1x4x64xf32, #tpu.memory_space<vmem>>) attributes {dimension_semantics = [#tpu.dimension_semantics<parallel>], iteration_bounds = array<i64: 2>, scalar_prefetch = 0 : i64, scratch_operands = 0 : i64, tpu.core_type = #tpu.core_type<tc>, window_params = [{transform_indices = @transform_0, window_bounds = array<i64: 1, 64, 256>}, {pipeline_mode = #tpu.pipeline_mode<synchronous>, transform_indices = @transform_1, window_bounds = array<i64: 4, 64>}, {pipeline_mode = #tpu.pipeline_mode<synchronous>, transform_indices = @transform_2, window_bounds = array<i64: 4, 1>}, {pipeline_mode = #tpu.pipeline_mode<synchronous>, transform_indices = @transform_3, window_bounds = array<i64: 4, 64>}, {pipeline_mode = #tpu.pipeline_mode<synchronous>, transform_indices = @transform_4, window_bounds = array<i64: 1, 64>}, {pipeline_mode = #tpu.pipeline_mode<synchronous>, transform_indices = @transform_5, window_bounds = array<i64: 1, 64>}, {pipeline_mode = #tpu.pipeline_mode<synchronous>, transform_indices = @transform_6, window_bounds = array<i64: 64, 1536>}, {pipeline_mode = #tpu.pipeline_mode<synchronous>, transform_indices = @transform_7, window_bounds = array<i64: 512, 64>}, {pipeline_mode = #tpu.pipeline_mode<synchronous>, transform_indices = @transform_8, window_bounds = array<i64: 1, 64>}, {pipeline_mode = #tpu.pipeline_mode<synchronous>, transform_indices = @transform_9, window_bounds = array<i64: 1, 64>}, {pipeline_mode = #tpu.pipeline_mode<synchronous>, transform_indices = @transform_10, window_bounds = array<i64: 1, 64>}, {pipeline_mode = #tpu.pipeline_mode<synchronous>, transform_indices = @transform_11, window_bounds = array<i64: 64, 64>}, {pipeline_mode = #tpu.pipeline_mode<synchronous>, transform_indices = @transform_12, window_bounds = array<i64: 1, 64>}, {pipeline_mode = #tpu.pipeline_mode<synchronous>, transform_indices = @transform_13, window_bounds = array<i64: 64, 64>}, {pipeline_mode = #tpu.pipeline_mode<synchronous>, transform_indices = @transform_14, window_bounds = array<i64: 1, 64>}, {transform_indices = @transform_15, window_bounds = array<i64: 1, 4, 64>}]} {
    %c0 = arith.constant 0 : index
    %c0_0 = arith.constant 0 : index
    %c0_1 = arith.constant 0 : index
    %0 = vector.load %arg1[%c0, %c0_0, %c0_1] : memref<1x64x256xf32, #tpu.memory_space<vmem>>, vector<1x64x256xf32>
    %1 = vector.shape_cast %0 : vector<1x64x256xf32> to vector<64x256xf32>
    %c0_2 = arith.constant 0 : index
    %c0_3 = arith.constant 0 : index
    %2 = vector.load %arg2[%c0_2, %c0_3] : memref<4x64xf32, #tpu.memory_space<vmem>>, vector<4x64xf32>
    %cst = arith.constant dense<0.000000e+00> : vector<4x256xf32>
    %3 = tpu.matmul %2, %1, %cst {dimension_numbers = #tpu.dot_dimension_numbers<[1], [0], [0], [1], [0, 0, 1, 1], [], []>} : vector<4x64xf32>, vector<64x256xf32>, vector<4x256xf32> -> vector<4x256xf32>
    %c0_4 = arith.constant 0 : index
    %c0_5 = arith.constant 0 : index
    %4 = vector.load %arg3[%c0_4, %c0_5] : memref<4x1xf32, #tpu.memory_space<vmem>>, vector<4x1xf32>
    %5 = vector.broadcast %4 : vector<4x1xf32> to vector<4x256xf32>
    %6 = arith.addf %3, %5 : vector<4x256xf32>
    %cst_6 = arith.constant dense<0xFF800000> : vector<4xf32>
    %7 = vector.multi_reduction <maximumf>, %6, %cst_6 [1] : vector<4x256xf32> to vector<4xf32>
    %8 = vector.shape_cast %7 : vector<4xf32> to vector<4x1xf32>
    %9 = vector.broadcast %8 : vector<4x1xf32> to vector<4x256xf32>
    %10 = arith.subf %6, %9 : vector<4x256xf32>
    %11 = math.exp %10 : vector<4x256xf32>
    %cst_7 = arith.constant dense<0.000000e+00> : vector<4xf32>
    %12 = vector.multi_reduction <add>, %11, %cst_7 [1] : vector<4x256xf32> to vector<4xf32>
    %13 = vector.shape_cast %12 : vector<4xf32> to vector<4x1xf32>
    %cst_8 = arith.constant dense<0.000000e+00> : vector<4x64xf32>
    %14 = tpu.matmul %11, %1, %cst_8 {dimension_numbers = #tpu.dot_dimension_numbers<[1], [1], [0], [0], [0, 0, 1, 0], [], []>} : vector<4x256xf32>, vector<64x256xf32>, vector<4x64xf32> -> vector<4x64xf32>
    %15 = vector.broadcast %13 : vector<4x1xf32> to vector<4x64xf32>
    %16 = arith.divf %14, %15 : vector<4x64xf32>
    %c0_9 = arith.constant 0 : index
    %c0_10 = arith.constant 0 : index
    %17 = vector.load %arg4[%c0_9, %c0_10] : memref<4x64xf32, #tpu.memory_space<vmem>>, vector<4x64xf32>
    %18 = arith.addf %16, %17 : vector<4x64xf32>
    %c0_11 = arith.constant 0 : index
    %c0_12 = arith.constant 0 : index
    %19 = vector.load %arg5[%c0_11, %c0_12] : memref<1x64xf32, #tpu.memory_space<vmem>>, vector<1x64xf32>
    %c0_13 = arith.constant 0 : index
    %c0_14 = arith.constant 0 : index
    %20 = vector.load %arg6[%c0_13, %c0_14] : memref<1x64xf32, #tpu.memory_space<vmem>>, vector<1x64xf32>
    %cst_15 = arith.constant dense<0.000000e+00> : vector<4xf32>
    %21 = vector.multi_reduction <add>, %18, %cst_15 [1] : vector<4x64xf32> to vector<4xf32>
    %22 = vector.shape_cast %21 : vector<4xf32> to vector<4x1xf32>
    %cst_16 = arith.constant 6.400000e+01 : f32
    %23 = vector.broadcast %cst_16 : f32 to vector<4x1xf32>
    %24 = arith.divf %22, %23 : vector<4x1xf32>
    %25 = vector.broadcast %24 : vector<4x1xf32> to vector<4x64xf32>
    %26 = arith.subf %18, %25 : vector<4x64xf32>
    %27 = arith.mulf %26, %26 : vector<4x64xf32>
    %cst_17 = arith.constant dense<0.000000e+00> : vector<4xf32>
    %28 = vector.multi_reduction <add>, %27, %cst_17 [1] : vector<4x64xf32> to vector<4xf32>
    %29 = vector.shape_cast %28 : vector<4xf32> to vector<4x1xf32>
    %cst_18 = arith.constant 6.400000e+01 : f32
    %30 = vector.broadcast %cst_18 : f32 to vector<4x1xf32>
    %31 = arith.divf %29, %30 : vector<4x1xf32>
    %32 = vector.broadcast %24 : vector<4x1xf32> to vector<4x64xf32>
    %33 = arith.subf %18, %32 : vector<4x64xf32>
    %cst_19 = arith.constant 9.99999974E-6 : f32
    %34 = vector.broadcast %cst_19 : f32 to vector<4x1xf32>
    %35 = arith.addf %31, %34 : vector<4x1xf32>
    %36 = math.rsqrt %35 : vector<4x1xf32>
    %37 = vector.broadcast %36 : vector<4x1xf32> to vector<4x64xf32>
    %38 = arith.mulf %33, %37 : vector<4x64xf32>
    %39 = vector.broadcast %19 : vector<1x64xf32> to vector<4x64xf32>
    %40 = arith.mulf %38, %39 : vector<4x64xf32>
    %41 = vector.broadcast %20 : vector<1x64xf32> to vector<4x64xf32>
    %42 = arith.addf %40, %41 : vector<4x64xf32>
    %c0_20 = arith.constant 0 : index
    %c0_21 = arith.constant 0 : index
    %43 = vector.load %arg7[%c0_20, %c0_21] : memref<64x1536xf32, #tpu.memory_space<vmem>>, vector<64x1536xf32>
    %cst_22 = arith.constant dense<0.000000e+00> : vector<4x1536xf32>
    %44 = tpu.matmul %42, %43, %cst_22 {dimension_numbers = #tpu.dot_dimension_numbers<[1], [0], [0], [1], [0, 0, 1, 1], [], []>} : vector<4x64xf32>, vector<64x1536xf32>, vector<4x1536xf32> -> vector<4x1536xf32>
    %45 = vector.extract_strided_slice %44 {offsets = [0, 0], sizes = [4, 512], strides = [1, 1]} : vector<4x1536xf32> to vector<4x512xf32>
    %46 = vector.extract_strided_slice %44 {offsets = [0, 512], sizes = [4, 512], strides = [1, 1]} : vector<4x1536xf32> to vector<4x512xf32>
    %47 = vector.extract_strided_slice %44 {offsets = [0, 1024], sizes = [4, 512], strides = [1, 1]} : vector<4x1536xf32> to vector<4x512xf32>
    %c0_23 = arith.constant 0 : index
    %c0_24 = arith.constant 0 : index
    %48 = vector.load %arg8[%c0_23, %c0_24] : memref<512x64xf32, #tpu.memory_space<vmem>>, vector<512x64xf32>
    %cst_25 = arith.constant 0.000000e+00 : f32
    %49 = vector.broadcast %cst_25 : f32 to vector<4x64xf32>
    %50 = vector.extract_strided_slice %45 {offsets = [0, 0], sizes = [4, 64], strides = [1, 1]} : vector<4x512xf32> to vector<4x64xf32>
    %51 = vector.extract_strided_slice %46 {offsets = [0, 0], sizes = [4, 64], strides = [1, 1]} : vector<4x512xf32> to vector<4x64xf32>
    %52 = vector.extract_strided_slice %47 {offsets = [0, 0], sizes = [4, 64], strides = [1, 1]} : vector<4x512xf32> to vector<4x64xf32>
    %cst_26 = arith.constant dense<0.000000e+00> : vector<4x4xf32>
    %53 = tpu.matmul %50, %51, %cst_26 {dimension_numbers = #tpu.dot_dimension_numbers<[1], [1], [0], [0], [0, 0, 1, 0], [], []>} : vector<4x64xf32>, vector<4x64xf32>, vector<4x4xf32> -> vector<4x4xf32>
    %cst_27 = arith.constant 1.250000e-01 : f32
    %54 = vector.broadcast %cst_27 : f32 to vector<4x4xf32>
    %55 = arith.mulf %53, %54 : vector<4x4xf32>
    %cst_28 = arith.constant dense<0xFF800000> : vector<4xf32>
    %56 = vector.multi_reduction <maximumf>, %55, %cst_28 [1] : vector<4x4xf32> to vector<4xf32>
    %57 = vector.shape_cast %56 : vector<4xf32> to vector<4x1xf32>
    %58 = vector.broadcast %57 : vector<4x1xf32> to vector<4x4xf32>
    %59 = arith.subf %55, %58 : vector<4x4xf32>
    %60 = math.exp %59 : vector<4x4xf32>
    %cst_29 = arith.constant dense<0.000000e+00> : vector<4xf32>
    %61 = vector.multi_reduction <add>, %60, %cst_29 [1] : vector<4x4xf32> to vector<4xf32>
    %62 = vector.shape_cast %61 : vector<4xf32> to vector<4x1xf32>
    %cst_30 = arith.constant dense<0.000000e+00> : vector<4x64xf32>
    %63 = tpu.matmul %60, %52, %cst_30 {dimension_numbers = #tpu.dot_dimension_numbers<[1], [0], [0], [1], [0, 0, 1, 1], [], []>} : vector<4x4xf32>, vector<4x64xf32>, vector<4x64xf32> -> vector<4x64xf32>
    %64 = vector.broadcast %62 : vector<4x1xf32> to vector<4x64xf32>
    %65 = arith.divf %63, %64 : vector<4x64xf32>
    %66 = vector.extract_strided_slice %48 {offsets = [0, 0], sizes = [64, 64], strides = [1, 1]} : vector<512x64xf32> to vector<64x64xf32>
    %cst_31 = arith.constant dense<0.000000e+00> : vector<4x64xf32>
    %67 = tpu.matmul %65, %66, %cst_31 {dimension_numbers = #tpu.dot_dimension_numbers<[1], [0], [0], [1], [0, 0, 1, 1], [], []>} : vector<4x64xf32>, vector<64x64xf32>, vector<4x64xf32> -> vector<4x64xf32>
    %68 = arith.addf %49, %67 : vector<4x64xf32>
    %69 = vector.extract_strided_slice %45 {offsets = [0, 64], sizes = [4, 64], strides = [1, 1]} : vector<4x512xf32> to vector<4x64xf32>
    %70 = vector.extract_strided_slice %46 {offsets = [0, 64], sizes = [4, 64], strides = [1, 1]} : vector<4x512xf32> to vector<4x64xf32>
    %71 = vector.extract_strided_slice %47 {offsets = [0, 64], sizes = [4, 64], strides = [1, 1]} : vector<4x512xf32> to vector<4x64xf32>
    %cst_32 = arith.constant dense<0.000000e+00> : vector<4x4xf32>
    %72 = tpu.matmul %69, %70, %cst_32 {dimension_numbers = #tpu.dot_dimension_numbers<[1], [1], [0], [0], [0, 0, 1, 0], [], []>} : vector<4x64xf32>, vector<4x64xf32>, vector<4x4xf32> -> vector<4x4xf32>
    %cst_33 = arith.constant 1.250000e-01 : f32
    %73 = vector.broadcast %cst_33 : f32 to vector<4x4xf32>
    %74 = arith.mulf %72, %73 : vector<4x4xf32>
    %cst_34 = arith.constant dense<0xFF800000> : vector<4xf32>
    %75 = vector.multi_reduction <maximumf>, %74, %cst_34 [1] : vector<4x4xf32> to vector<4xf32>
    %76 = vector.shape_cast %75 : vector<4xf32> to vector<4x1xf32>
    %77 = vector.broadcast %76 : vector<4x1xf32> to vector<4x4xf32>
    %78 = arith.subf %74, %77 : vector<4x4xf32>
    %79 = math.exp %78 : vector<4x4xf32>
    %cst_35 = arith.constant dense<0.000000e+00> : vector<4xf32>
    %80 = vector.multi_reduction <add>, %79, %cst_35 [1] : vector<4x4xf32> to vector<4xf32>
    %81 = vector.shape_cast %80 : vector<4xf32> to vector<4x1xf32>
    %cst_36 = arith.constant dense<0.000000e+00> : vector<4x64xf32>
    %82 = tpu.matmul %79, %71, %cst_36 {dimension_numbers = #tpu.dot_dimension_numbers<[1], [0], [0], [1], [0, 0, 1, 1], [], []>} : vector<4x4xf32>, vector<4x64xf32>, vector<4x64xf32> -> vector<4x64xf32>
    %83 = vector.broadcast %81 : vector<4x1xf32> to vector<4x64xf32>
    %84 = arith.divf %82, %83 : vector<4x64xf32>
    %85 = vector.extract_strided_slice %48 {offsets = [64, 0], sizes = [64, 64], strides = [1, 1]} : vector<512x64xf32> to vector<64x64xf32>
    %cst_37 = arith.constant dense<0.000000e+00> : vector<4x64xf32>
    %86 = tpu.matmul %84, %85, %cst_37 {dimension_numbers = #tpu.dot_dimension_numbers<[1], [0], [0], [1], [0, 0, 1, 1], [], []>} : vector<4x64xf32>, vector<64x64xf32>, vector<4x64xf32> -> vector<4x64xf32>
    %87 = arith.addf %68, %86 : vector<4x64xf32>
    %88 = vector.extract_strided_slice %45 {offsets = [0, 128], sizes = [4, 64], strides = [1, 1]} : vector<4x512xf32> to vector<4x64xf32>
    %89 = vector.extract_strided_slice %46 {offsets = [0, 128], sizes = [4, 64], strides = [1, 1]} : vector<4x512xf32> to vector<4x64xf32>
    %90 = vector.extract_strided_slice %47 {offsets = [0, 128], sizes = [4, 64], strides = [1, 1]} : vector<4x512xf32> to vector<4x64xf32>
    %cst_38 = arith.constant dense<0.000000e+00> : vector<4x4xf32>
    %91 = tpu.matmul %88, %89, %cst_38 {dimension_numbers = #tpu.dot_dimension_numbers<[1], [1], [0], [0], [0, 0, 1, 0], [], []>} : vector<4x64xf32>, vector<4x64xf32>, vector<4x4xf32> -> vector<4x4xf32>
    %cst_39 = arith.constant 1.250000e-01 : f32
    %92 = vector.broadcast %cst_39 : f32 to vector<4x4xf32>
    %93 = arith.mulf %91, %92 : vector<4x4xf32>
    %cst_40 = arith.constant dense<0xFF800000> : vector<4xf32>
    %94 = vector.multi_reduction <maximumf>, %93, %cst_40 [1] : vector<4x4xf32> to vector<4xf32>
    %95 = vector.shape_cast %94 : vector<4xf32> to vector<4x1xf32>
    %96 = vector.broadcast %95 : vector<4x1xf32> to vector<4x4xf32>
    %97 = arith.subf %93, %96 : vector<4x4xf32>
    %98 = math.exp %97 : vector<4x4xf32>
    %cst_41 = arith.constant dense<0.000000e+00> : vector<4xf32>
    %99 = vector.multi_reduction <add>, %98, %cst_41 [1] : vector<4x4xf32> to vector<4xf32>
    %100 = vector.shape_cast %99 : vector<4xf32> to vector<4x1xf32>
    %cst_42 = arith.constant dense<0.000000e+00> : vector<4x64xf32>
    %101 = tpu.matmul %98, %90, %cst_42 {dimension_numbers = #tpu.dot_dimension_numbers<[1], [0], [0], [1], [0, 0, 1, 1], [], []>} : vector<4x4xf32>, vector<4x64xf32>, vector<4x64xf32> -> vector<4x64xf32>
    %102 = vector.broadcast %100 : vector<4x1xf32> to vector<4x64xf32>
    %103 = arith.divf %101, %102 : vector<4x64xf32>
    %104 = vector.extract_strided_slice %48 {offsets = [128, 0], sizes = [64, 64], strides = [1, 1]} : vector<512x64xf32> to vector<64x64xf32>
    %cst_43 = arith.constant dense<0.000000e+00> : vector<4x64xf32>
    %105 = tpu.matmul %103, %104, %cst_43 {dimension_numbers = #tpu.dot_dimension_numbers<[1], [0], [0], [1], [0, 0, 1, 1], [], []>} : vector<4x64xf32>, vector<64x64xf32>, vector<4x64xf32> -> vector<4x64xf32>
    %106 = arith.addf %87, %105 : vector<4x64xf32>
    %107 = vector.extract_strided_slice %45 {offsets = [0, 192], sizes = [4, 64], strides = [1, 1]} : vector<4x512xf32> to vector<4x64xf32>
    %108 = vector.extract_strided_slice %46 {offsets = [0, 192], sizes = [4, 64], strides = [1, 1]} : vector<4x512xf32> to vector<4x64xf32>
    %109 = vector.extract_strided_slice %47 {offsets = [0, 192], sizes = [4, 64], strides = [1, 1]} : vector<4x512xf32> to vector<4x64xf32>
    %cst_44 = arith.constant dense<0.000000e+00> : vector<4x4xf32>
    %110 = tpu.matmul %107, %108, %cst_44 {dimension_numbers = #tpu.dot_dimension_numbers<[1], [1], [0], [0], [0, 0, 1, 0], [], []>} : vector<4x64xf32>, vector<4x64xf32>, vector<4x4xf32> -> vector<4x4xf32>
    %cst_45 = arith.constant 1.250000e-01 : f32
    %111 = vector.broadcast %cst_45 : f32 to vector<4x4xf32>
    %112 = arith.mulf %110, %111 : vector<4x4xf32>
    %cst_46 = arith.constant dense<0xFF800000> : vector<4xf32>
    %113 = vector.multi_reduction <maximumf>, %112, %cst_46 [1] : vector<4x4xf32> to vector<4xf32>
    %114 = vector.shape_cast %113 : vector<4xf32> to vector<4x1xf32>
    %115 = vector.broadcast %114 : vector<4x1xf32> to vector<4x4xf32>
    %116 = arith.subf %112, %115 : vector<4x4xf32>
    %117 = math.exp %116 : vector<4x4xf32>
    %cst_47 = arith.constant dense<0.000000e+00> : vector<4xf32>
    %118 = vector.multi_reduction <add>, %117, %cst_47 [1] : vector<4x4xf32> to vector<4xf32>
    %119 = vector.shape_cast %118 : vector<4xf32> to vector<4x1xf32>
    %cst_48 = arith.constant dense<0.000000e+00> : vector<4x64xf32>
    %120 = tpu.matmul %117, %109, %cst_48 {dimension_numbers = #tpu.dot_dimension_numbers<[1], [0], [0], [1], [0, 0, 1, 1], [], []>} : vector<4x4xf32>, vector<4x64xf32>, vector<4x64xf32> -> vector<4x64xf32>
    %121 = vector.broadcast %119 : vector<4x1xf32> to vector<4x64xf32>
    %122 = arith.divf %120, %121 : vector<4x64xf32>
    %123 = vector.extract_strided_slice %48 {offsets = [192, 0], sizes = [64, 64], strides = [1, 1]} : vector<512x64xf32> to vector<64x64xf32>
    %cst_49 = arith.constant dense<0.000000e+00> : vector<4x64xf32>
    %124 = tpu.matmul %122, %123, %cst_49 {dimension_numbers = #tpu.dot_dimension_numbers<[1], [0], [0], [1], [0, 0, 1, 1], [], []>} : vector<4x64xf32>, vector<64x64xf32>, vector<4x64xf32> -> vector<4x64xf32>
    %125 = arith.addf %106, %124 : vector<4x64xf32>
    %126 = vector.extract_strided_slice %45 {offsets = [0, 256], sizes = [4, 64], strides = [1, 1]} : vector<4x512xf32> to vector<4x64xf32>
    %127 = vector.extract_strided_slice %46 {offsets = [0, 256], sizes = [4, 64], strides = [1, 1]} : vector<4x512xf32> to vector<4x64xf32>
    %128 = vector.extract_strided_slice %47 {offsets = [0, 256], sizes = [4, 64], strides = [1, 1]} : vector<4x512xf32> to vector<4x64xf32>
    %cst_50 = arith.constant dense<0.000000e+00> : vector<4x4xf32>
    %129 = tpu.matmul %126, %127, %cst_50 {dimension_numbers = #tpu.dot_dimension_numbers<[1], [1], [0], [0], [0, 0, 1, 0], [], []>} : vector<4x64xf32>, vector<4x64xf32>, vector<4x4xf32> -> vector<4x4xf32>
    %cst_51 = arith.constant 1.250000e-01 : f32
    %130 = vector.broadcast %cst_51 : f32 to vector<4x4xf32>
    %131 = arith.mulf %129, %130 : vector<4x4xf32>
    %cst_52 = arith.constant dense<0xFF800000> : vector<4xf32>
    %132 = vector.multi_reduction <maximumf>, %131, %cst_52 [1] : vector<4x4xf32> to vector<4xf32>
    %133 = vector.shape_cast %132 : vector<4xf32> to vector<4x1xf32>
    %134 = vector.broadcast %133 : vector<4x1xf32> to vector<4x4xf32>
    %135 = arith.subf %131, %134 : vector<4x4xf32>
    %136 = math.exp %135 : vector<4x4xf32>
    %cst_53 = arith.constant dense<0.000000e+00> : vector<4xf32>
    %137 = vector.multi_reduction <add>, %136, %cst_53 [1] : vector<4x4xf32> to vector<4xf32>
    %138 = vector.shape_cast %137 : vector<4xf32> to vector<4x1xf32>
    %cst_54 = arith.constant dense<0.000000e+00> : vector<4x64xf32>
    %139 = tpu.matmul %136, %128, %cst_54 {dimension_numbers = #tpu.dot_dimension_numbers<[1], [0], [0], [1], [0, 0, 1, 1], [], []>} : vector<4x4xf32>, vector<4x64xf32>, vector<4x64xf32> -> vector<4x64xf32>
    %140 = vector.broadcast %138 : vector<4x1xf32> to vector<4x64xf32>
    %141 = arith.divf %139, %140 : vector<4x64xf32>
    %142 = vector.extract_strided_slice %48 {offsets = [256, 0], sizes = [64, 64], strides = [1, 1]} : vector<512x64xf32> to vector<64x64xf32>
    %cst_55 = arith.constant dense<0.000000e+00> : vector<4x64xf32>
    %143 = tpu.matmul %141, %142, %cst_55 {dimension_numbers = #tpu.dot_dimension_numbers<[1], [0], [0], [1], [0, 0, 1, 1], [], []>} : vector<4x64xf32>, vector<64x64xf32>, vector<4x64xf32> -> vector<4x64xf32>
    %144 = arith.addf %125, %143 : vector<4x64xf32>
    %145 = vector.extract_strided_slice %45 {offsets = [0, 320], sizes = [4, 64], strides = [1, 1]} : vector<4x512xf32> to vector<4x64xf32>
    %146 = vector.extract_strided_slice %46 {offsets = [0, 320], sizes = [4, 64], strides = [1, 1]} : vector<4x512xf32> to vector<4x64xf32>
    %147 = vector.extract_strided_slice %47 {offsets = [0, 320], sizes = [4, 64], strides = [1, 1]} : vector<4x512xf32> to vector<4x64xf32>
    %cst_56 = arith.constant dense<0.000000e+00> : vector<4x4xf32>
    %148 = tpu.matmul %145, %146, %cst_56 {dimension_numbers = #tpu.dot_dimension_numbers<[1], [1], [0], [0], [0, 0, 1, 0], [], []>} : vector<4x64xf32>, vector<4x64xf32>, vector<4x4xf32> -> vector<4x4xf32>
    %cst_57 = arith.constant 1.250000e-01 : f32
    %149 = vector.broadcast %cst_57 : f32 to vector<4x4xf32>
    %150 = arith.mulf %148, %149 : vector<4x4xf32>
    %cst_58 = arith.constant dense<0xFF800000> : vector<4xf32>
    %151 = vector.multi_reduction <maximumf>, %150, %cst_58 [1] : vector<4x4xf32> to vector<4xf32>
    %152 = vector.shape_cast %151 : vector<4xf32> to vector<4x1xf32>
    %153 = vector.broadcast %152 : vector<4x1xf32> to vector<4x4xf32>
    %154 = arith.subf %150, %153 : vector<4x4xf32>
    %155 = math.exp %154 : vector<4x4xf32>
    %cst_59 = arith.constant dense<0.000000e+00> : vector<4xf32>
    %156 = vector.multi_reduction <add>, %155, %cst_59 [1] : vector<4x4xf32> to vector<4xf32>
    %157 = vector.shape_cast %156 : vector<4xf32> to vector<4x1xf32>
    %cst_60 = arith.constant dense<0.000000e+00> : vector<4x64xf32>
    %158 = tpu.matmul %155, %147, %cst_60 {dimension_numbers = #tpu.dot_dimension_numbers<[1], [0], [0], [1], [0, 0, 1, 1], [], []>} : vector<4x4xf32>, vector<4x64xf32>, vector<4x64xf32> -> vector<4x64xf32>
    %159 = vector.broadcast %157 : vector<4x1xf32> to vector<4x64xf32>
    %160 = arith.divf %158, %159 : vector<4x64xf32>
    %161 = vector.extract_strided_slice %48 {offsets = [320, 0], sizes = [64, 64], strides = [1, 1]} : vector<512x64xf32> to vector<64x64xf32>
    %cst_61 = arith.constant dense<0.000000e+00> : vector<4x64xf32>
    %162 = tpu.matmul %160, %161, %cst_61 {dimension_numbers = #tpu.dot_dimension_numbers<[1], [0], [0], [1], [0, 0, 1, 1], [], []>} : vector<4x64xf32>, vector<64x64xf32>, vector<4x64xf32> -> vector<4x64xf32>
    %163 = arith.addf %144, %162 : vector<4x64xf32>
    %164 = vector.extract_strided_slice %45 {offsets = [0, 384], sizes = [4, 64], strides = [1, 1]} : vector<4x512xf32> to vector<4x64xf32>
    %165 = vector.extract_strided_slice %46 {offsets = [0, 384], sizes = [4, 64], strides = [1, 1]} : vector<4x512xf32> to vector<4x64xf32>
    %166 = vector.extract_strided_slice %47 {offsets = [0, 384], sizes = [4, 64], strides = [1, 1]} : vector<4x512xf32> to vector<4x64xf32>
    %cst_62 = arith.constant dense<0.000000e+00> : vector<4x4xf32>
    %167 = tpu.matmul %164, %165, %cst_62 {dimension_numbers = #tpu.dot_dimension_numbers<[1], [1], [0], [0], [0, 0, 1, 0], [], []>} : vector<4x64xf32>, vector<4x64xf32>, vector<4x4xf32> -> vector<4x4xf32>
    %cst_63 = arith.constant 1.250000e-01 : f32
    %168 = vector.broadcast %cst_63 : f32 to vector<4x4xf32>
    %169 = arith.mulf %167, %168 : vector<4x4xf32>
    %cst_64 = arith.constant dense<0xFF800000> : vector<4xf32>
    %170 = vector.multi_reduction <maximumf>, %169, %cst_64 [1] : vector<4x4xf32> to vector<4xf32>
    %171 = vector.shape_cast %170 : vector<4xf32> to vector<4x1xf32>
    %172 = vector.broadcast %171 : vector<4x1xf32> to vector<4x4xf32>
    %173 = arith.subf %169, %172 : vector<4x4xf32>
    %174 = math.exp %173 : vector<4x4xf32>
    %cst_65 = arith.constant dense<0.000000e+00> : vector<4xf32>
    %175 = vector.multi_reduction <add>, %174, %cst_65 [1] : vector<4x4xf32> to vector<4xf32>
    %176 = vector.shape_cast %175 : vector<4xf32> to vector<4x1xf32>
    %cst_66 = arith.constant dense<0.000000e+00> : vector<4x64xf32>
    %177 = tpu.matmul %174, %166, %cst_66 {dimension_numbers = #tpu.dot_dimension_numbers<[1], [0], [0], [1], [0, 0, 1, 1], [], []>} : vector<4x4xf32>, vector<4x64xf32>, vector<4x64xf32> -> vector<4x64xf32>
    %178 = vector.broadcast %176 : vector<4x1xf32> to vector<4x64xf32>
    %179 = arith.divf %177, %178 : vector<4x64xf32>
    %180 = vector.extract_strided_slice %48 {offsets = [384, 0], sizes = [64, 64], strides = [1, 1]} : vector<512x64xf32> to vector<64x64xf32>
    %cst_67 = arith.constant dense<0.000000e+00> : vector<4x64xf32>
    %181 = tpu.matmul %179, %180, %cst_67 {dimension_numbers = #tpu.dot_dimension_numbers<[1], [0], [0], [1], [0, 0, 1, 1], [], []>} : vector<4x64xf32>, vector<64x64xf32>, vector<4x64xf32> -> vector<4x64xf32>
    %182 = arith.addf %163, %181 : vector<4x64xf32>
    %183 = vector.extract_strided_slice %45 {offsets = [0, 448], sizes = [4, 64], strides = [1, 1]} : vector<4x512xf32> to vector<4x64xf32>
    %184 = vector.extract_strided_slice %46 {offsets = [0, 448], sizes = [4, 64], strides = [1, 1]} : vector<4x512xf32> to vector<4x64xf32>
    %185 = vector.extract_strided_slice %47 {offsets = [0, 448], sizes = [4, 64], strides = [1, 1]} : vector<4x512xf32> to vector<4x64xf32>
    %cst_68 = arith.constant dense<0.000000e+00> : vector<4x4xf32>
    %186 = tpu.matmul %183, %184, %cst_68 {dimension_numbers = #tpu.dot_dimension_numbers<[1], [1], [0], [0], [0, 0, 1, 0], [], []>} : vector<4x64xf32>, vector<4x64xf32>, vector<4x4xf32> -> vector<4x4xf32>
    %cst_69 = arith.constant 1.250000e-01 : f32
    %187 = vector.broadcast %cst_69 : f32 to vector<4x4xf32>
    %188 = arith.mulf %186, %187 : vector<4x4xf32>
    %cst_70 = arith.constant dense<0xFF800000> : vector<4xf32>
    %189 = vector.multi_reduction <maximumf>, %188, %cst_70 [1] : vector<4x4xf32> to vector<4xf32>
    %190 = vector.shape_cast %189 : vector<4xf32> to vector<4x1xf32>
    %191 = vector.broadcast %190 : vector<4x1xf32> to vector<4x4xf32>
    %192 = arith.subf %188, %191 : vector<4x4xf32>
    %193 = math.exp %192 : vector<4x4xf32>
    %cst_71 = arith.constant dense<0.000000e+00> : vector<4xf32>
    %194 = vector.multi_reduction <add>, %193, %cst_71 [1] : vector<4x4xf32> to vector<4xf32>
    %195 = vector.shape_cast %194 : vector<4xf32> to vector<4x1xf32>
    %cst_72 = arith.constant dense<0.000000e+00> : vector<4x64xf32>
    %196 = tpu.matmul %193, %185, %cst_72 {dimension_numbers = #tpu.dot_dimension_numbers<[1], [0], [0], [1], [0, 0, 1, 1], [], []>} : vector<4x4xf32>, vector<4x64xf32>, vector<4x64xf32> -> vector<4x64xf32>
    %197 = vector.broadcast %195 : vector<4x1xf32> to vector<4x64xf32>
    %198 = arith.divf %196, %197 : vector<4x64xf32>
    %199 = vector.extract_strided_slice %48 {offsets = [448, 0], sizes = [64, 64], strides = [1, 1]} : vector<512x64xf32> to vector<64x64xf32>
    %cst_73 = arith.constant dense<0.000000e+00> : vector<4x64xf32>
    %200 = tpu.matmul %198, %199, %cst_73 {dimension_numbers = #tpu.dot_dimension_numbers<[1], [0], [0], [1], [0, 0, 1, 1], [], []>} : vector<4x64xf32>, vector<64x64xf32>, vector<4x64xf32> -> vector<4x64xf32>
    %201 = arith.addf %182, %200 : vector<4x64xf32>
    %202 = arith.addf %18, %201 : vector<4x64xf32>
    %c0_74 = arith.constant 0 : index
    %c0_75 = arith.constant 0 : index
    %203 = vector.load %arg9[%c0_74, %c0_75] : memref<1x64xf32, #tpu.memory_space<vmem>>, vector<1x64xf32>
    %204 = vector.broadcast %203 : vector<1x64xf32> to vector<4x64xf32>
    %205 = arith.addf %202, %204 : vector<4x64xf32>
    %c0_76 = arith.constant 0 : index
    %c0_77 = arith.constant 0 : index
    %206 = vector.load %arg10[%c0_76, %c0_77] : memref<1x64xf32, #tpu.memory_space<vmem>>, vector<1x64xf32>
    %c0_78 = arith.constant 0 : index
    %c0_79 = arith.constant 0 : index
    %207 = vector.load %arg11[%c0_78, %c0_79] : memref<1x64xf32, #tpu.memory_space<vmem>>, vector<1x64xf32>
    %cst_80 = arith.constant dense<0.000000e+00> : vector<4xf32>
    %208 = vector.multi_reduction <add>, %205, %cst_80 [1] : vector<4x64xf32> to vector<4xf32>
    %209 = vector.shape_cast %208 : vector<4xf32> to vector<4x1xf32>
    %cst_81 = arith.constant 6.400000e+01 : f32
    %210 = vector.broadcast %cst_81 : f32 to vector<4x1xf32>
    %211 = arith.divf %209, %210 : vector<4x1xf32>
    %212 = vector.broadcast %211 : vector<4x1xf32> to vector<4x64xf32>
    %213 = arith.subf %205, %212 : vector<4x64xf32>
    %214 = arith.mulf %213, %213 : vector<4x64xf32>
    %cst_82 = arith.constant dense<0.000000e+00> : vector<4xf32>
    %215 = vector.multi_reduction <add>, %214, %cst_82 [1] : vector<4x64xf32> to vector<4xf32>
    %216 = vector.shape_cast %215 : vector<4xf32> to vector<4x1xf32>
    %cst_83 = arith.constant 6.400000e+01 : f32
    %217 = vector.broadcast %cst_83 : f32 to vector<4x1xf32>
    %218 = arith.divf %216, %217 : vector<4x1xf32>
    %219 = vector.broadcast %211 : vector<4x1xf32> to vector<4x64xf32>
    %220 = arith.subf %205, %219 : vector<4x64xf32>
    %cst_84 = arith.constant 9.99999974E-6 : f32
    %221 = vector.broadcast %cst_84 : f32 to vector<4x1xf32>
    %222 = arith.addf %218, %221 : vector<4x1xf32>
    %223 = math.rsqrt %222 : vector<4x1xf32>
    %224 = vector.broadcast %223 : vector<4x1xf32> to vector<4x64xf32>
    %225 = arith.mulf %220, %224 : vector<4x64xf32>
    %226 = vector.broadcast %206 : vector<1x64xf32> to vector<4x64xf32>
    %227 = arith.mulf %225, %226 : vector<4x64xf32>
    %228 = vector.broadcast %207 : vector<1x64xf32> to vector<4x64xf32>
    %229 = arith.addf %227, %228 : vector<4x64xf32>
    %c0_85 = arith.constant 0 : index
    %c0_86 = arith.constant 0 : index
    %230 = vector.load %arg12[%c0_85, %c0_86] : memref<64x64xf32, #tpu.memory_space<vmem>>, vector<64x64xf32>
    %cst_87 = arith.constant dense<0.000000e+00> : vector<4x64xf32>
    %231 = tpu.matmul %229, %230, %cst_87 {dimension_numbers = #tpu.dot_dimension_numbers<[1], [0], [0], [1], [0, 0, 1, 1], [], []>} : vector<4x64xf32>, vector<64x64xf32>, vector<4x64xf32> -> vector<4x64xf32>
    %c0_88 = arith.constant 0 : index
    %c0_89 = arith.constant 0 : index
    %232 = vector.load %arg13[%c0_88, %c0_89] : memref<1x64xf32, #tpu.memory_space<vmem>>, vector<1x64xf32>
    %233 = vector.broadcast %232 : vector<1x64xf32> to vector<4x64xf32>
    %234 = arith.addf %231, %233 : vector<4x64xf32>
    %cst_90 = arith.constant 5.000000e-01 : f32
    %235 = vector.broadcast %cst_90 : f32 to vector<4x64xf32>
    %236 = arith.mulf %235, %234 : vector<4x64xf32>
    %cst_91 = arith.constant 0.707106769 : f32
    %237 = vector.broadcast %cst_91 : f32 to vector<4x64xf32>
    %238 = arith.mulf %234, %237 : vector<4x64xf32>
    %239 = math.absf %238 : vector<4x64xf32>
    %cst_92 = arith.constant 0.327591091 : f32
    %240 = vector.broadcast %cst_92 : f32 to vector<4x64xf32>
    %241 = arith.mulf %240, %239 : vector<4x64xf32>
    %cst_93 = arith.constant 1.000000e+00 : f32
    %242 = vector.broadcast %cst_93 : f32 to vector<4x64xf32>
    %243 = arith.addf %242, %241 : vector<4x64xf32>
    %cst_94 = arith.constant 1.000000e+00 : f32
    %244 = vector.broadcast %cst_94 : f32 to vector<4x64xf32>
    %245 = arith.divf %244, %243 : vector<4x64xf32>
    %cst_95 = arith.constant 1.06140542 : f32
    %246 = vector.broadcast %cst_95 : f32 to vector<4x64xf32>
    %247 = arith.mulf %246, %245 : vector<4x64xf32>
    %cst_96 = arith.constant -1.45315206 : f32
    %248 = vector.broadcast %cst_96 : f32 to vector<4x64xf32>
    %249 = arith.addf %247, %248 : vector<4x64xf32>
    %250 = arith.mulf %249, %245 : vector<4x64xf32>
    %cst_97 = arith.constant 1.42141378 : f32
    %251 = vector.broadcast %cst_97 : f32 to vector<4x64xf32>
    %252 = arith.addf %250, %251 : vector<4x64xf32>
    %253 = arith.mulf %252, %245 : vector<4x64xf32>
    %cst_98 = arith.constant -0.284496725 : f32
    %254 = vector.broadcast %cst_98 : f32 to vector<4x64xf32>
    %255 = arith.addf %253, %254 : vector<4x64xf32>
    %256 = arith.mulf %255, %245 : vector<4x64xf32>
    %cst_99 = arith.constant 0.254829586 : f32
    %257 = vector.broadcast %cst_99 : f32 to vector<4x64xf32>
    %258 = arith.addf %256, %257 : vector<4x64xf32>
    %259 = arith.mulf %258, %245 : vector<4x64xf32>
    %cst_100 = arith.constant 0.000000e+00 : f32
    %260 = vector.broadcast %cst_100 : f32 to vector<4x64xf32>
    %261 = arith.subf %260, %239 : vector<4x64xf32>
    %262 = arith.mulf %261, %239 : vector<4x64xf32>
    %263 = math.exp %262 : vector<4x64xf32>
    %264 = arith.mulf %259, %263 : vector<4x64xf32>
    %cst_101 = arith.constant 1.000000e+00 : f32
    %265 = vector.broadcast %cst_101 : f32 to vector<4x64xf32>
    %266 = arith.subf %265, %264 : vector<4x64xf32>
    %cst_102 = arith.constant 0.000000e+00 : f32
    %267 = vector.broadcast %cst_102 : f32 to vector<4x64xf32>
    %268 = arith.cmpf olt, %238, %267 : vector<4x64xf32>
    %cst_103 = arith.constant 0.000000e+00 : f32
    %269 = vector.broadcast %cst_103 : f32 to vector<4x64xf32>
    %270 = arith.subf %269, %266 : vector<4x64xf32>
    %271 = arith.select %268, %270, %266 : vector<4x64xi1>, vector<4x64xf32>
    %cst_104 = arith.constant 1.000000e+00 : f32
    %272 = vector.broadcast %cst_104 : f32 to vector<4x64xf32>
    %273 = arith.addf %272, %271 : vector<4x64xf32>
    %274 = arith.mulf %236, %273 : vector<4x64xf32>
    %c0_105 = arith.constant 0 : index
    %c0_106 = arith.constant 0 : index
    %275 = vector.load %arg14[%c0_105, %c0_106] : memref<64x64xf32, #tpu.memory_space<vmem>>, vector<64x64xf32>
    %cst_107 = arith.constant dense<0.000000e+00> : vector<4x64xf32>
    %276 = tpu.matmul %274, %275, %cst_107 {dimension_numbers = #tpu.dot_dimension_numbers<[1], [0], [0], [1], [0, 0, 1, 1], [], []>} : vector<4x64xf32>, vector<64x64xf32>, vector<4x64xf32> -> vector<4x64xf32>
    %c0_108 = arith.constant 0 : index
    %c0_109 = arith.constant 0 : index
    %277 = vector.load %arg15[%c0_108, %c0_109] : memref<1x64xf32, #tpu.memory_space<vmem>>, vector<1x64xf32>
    %278 = vector.broadcast %277 : vector<1x64xf32> to vector<4x64xf32>
    %279 = arith.addf %276, %278 : vector<4x64xf32>
    %280 = arith.addf %205, %279 : vector<4x64xf32>
    %c0_110 = arith.constant 0 : index
    %c0_111 = arith.constant 0 : index
    %c0_112 = arith.constant 0 : index
    %281 = vector.load %arg16[%c0_110, %c0_111, %c0_112] : memref<1x4x64xf32, #tpu.memory_space<vmem>>, vector<1x4x64xf32>
    %282 = vector.shape_cast %281 : vector<1x4x64xf32> to vector<4x64xf32>
    %283 = vector.shape_cast %280 : vector<4x64xf32> to vector<1x4x64xf32>
    tpu.vector_store %arg16[%c0_110, %c0_111, %c0_112], %283 {strides = array<i32>} : memref<1x4x64xf32, #tpu.memory_space<vmem>>, vector<1x4x64xf32>,
    return
  }
  func.func @transform_0(%arg0: i32) -> (i32, i32, i32) {
    %c0_i32 = arith.constant 0 : i32
    %c0_i32_0 = arith.constant 0 : i32
    %c0_i32_1 = arith.constant 0 : i32
    return %arg0, %c0_i32, %c0_i32_0 : i32, i32, i32
  }
  func.func @transform_1(%arg0: i32) -> (i32, i32) {
    %c0_i32 = arith.constant 0 : i32
    %c0_i32_0 = arith.constant 0 : i32
    %c0_i32_1 = arith.constant 0 : i32
    return %c0_i32, %c0_i32_0 : i32, i32
  }
  func.func @transform_2(%arg0: i32) -> (i32, i32) {
    %c0_i32 = arith.constant 0 : i32
    %c0_i32_0 = arith.constant 0 : i32
    %c0_i32_1 = arith.constant 0 : i32
    return %c0_i32, %c0_i32_0 : i32, i32
  }
  func.func @transform_3(%arg0: i32) -> (i32, i32) {
    %c0_i32 = arith.constant 0 : i32
    %c0_i32_0 = arith.constant 0 : i32
    %c0_i32_1 = arith.constant 0 : i32
    return %c0_i32, %c0_i32_0 : i32, i32
  }
  func.func @transform_4(%arg0: i32) -> (i32, i32) {
    %c0_i32 = arith.constant 0 : i32
    %c0_i32_0 = arith.constant 0 : i32
    %c0_i32_1 = arith.constant 0 : i32
    return %c0_i32, %c0_i32_0 : i32, i32
  }
  func.func @transform_5(%arg0: i32) -> (i32, i32) {
    %c0_i32 = arith.constant 0 : i32
    %c0_i32_0 = arith.constant 0 : i32
    %c0_i32_1 = arith.constant 0 : i32
    return %c0_i32, %c0_i32_0 : i32, i32
  }
  func.func @transform_6(%arg0: i32) -> (i32, i32) {
    %c0_i32 = arith.constant 0 : i32
    %c0_i32_0 = arith.constant 0 : i32
    %c0_i32_1 = arith.constant 0 : i32
    return %c0_i32, %c0_i32_0 : i32, i32
  }
  func.func @transform_7(%arg0: i32) -> (i32, i32) {
    %c0_i32 = arith.constant 0 : i32
    %c0_i32_0 = arith.constant 0 : i32
    %c0_i32_1 = arith.constant 0 : i32
    return %c0_i32, %c0_i32_0 : i32, i32
  }
  func.func @transform_8(%arg0: i32) -> (i32, i32) {
    %c0_i32 = arith.constant 0 : i32
    %c0_i32_0 = arith.constant 0 : i32
    %c0_i32_1 = arith.constant 0 : i32
    return %c0_i32, %c0_i32_0 : i32, i32
  }
  func.func @transform_9(%arg0: i32) -> (i32, i32) {
    %c0_i32 = arith.constant 0 : i32
    %c0_i32_0 = arith.constant 0 : i32
    %c0_i32_1 = arith.constant 0 : i32
    return %c0_i32, %c0_i32_0 : i32, i32
  }
  func.func @transform_10(%arg0: i32) -> (i32, i32) {
    %c0_i32 = arith.constant 0 : i32
    %c0_i32_0 = arith.constant 0 : i32
    %c0_i32_1 = arith.constant 0 : i32
    return %c0_i32, %c0_i32_0 : i32, i32
  }
  func.func @transform_11(%arg0: i32) -> (i32, i32) {
    %c0_i32 = arith.constant 0 : i32
    %c0_i32_0 = arith.constant 0 : i32
    %c0_i32_1 = arith.constant 0 : i32
    return %c0_i32, %c0_i32_0 : i32, i32
  }
  func.func @transform_12(%arg0: i32) -> (i32, i32) {
    %c0_i32 = arith.constant 0 : i32
    %c0_i32_0 = arith.constant 0 : i32
    %c0_i32_1 = arith.constant 0 : i32
    return %c0_i32, %c0_i32_0 : i32, i32
  }
  func.func @transform_13(%arg0: i32) -> (i32, i32) {
    %c0_i32 = arith.constant 0 : i32
    %c0_i32_0 = arith.constant 0 : i32
    %c0_i32_1 = arith.constant 0 : i32
    return %c0_i32, %c0_i32_0 : i32, i32
  }
  func.func @transform_14(%arg0: i32) -> (i32, i32) {
    %c0_i32 = arith.constant 0 : i32
    %c0_i32_0 = arith.constant 0 : i32
    %c0_i32_1 = arith.constant 0 : i32
    return %c0_i32, %c0_i32_0 : i32, i32
  }
  func.func @transform_15(%arg0: i32) -> (i32, i32, i32) {
    %c0_i32 = arith.constant 0 : i32
    %c0_i32_0 = arith.constant 0 : i32
    %c0_i32_1 = arith.constant 0 : i32
    return %arg0, %c0_i32, %c0_i32_0 : i32, i32, i32
  }
}

</mosaic_0001>

<llo_original>
// kernel: tpu_custom_call.1
$region0: #{tpu_custom_call.1}
  #allocation0 [shape = 'u32[]', space=smem, size = 0x4, offset = 0x4, fixed_abs, tag = 'smem constant byte address 0x4 - core index']
  #allocation1 [shape = 'u32[72,128]{1,0:T(1,128)}', space=vmem, size = 0x9000, scoped, tag = 'internal scratch']
  %s0 = inlined_call_operand.hbm [shape: f32[2,64,256], index: 0, kind: input, shape index: {}]
  %s1 = inlined_call_operand.vmem [shape: f32[4,64], index: 1, kind: input, shape index: {}]
  %s2 = inlined_call_operand.vmem [shape: f32[4,1], index: 2, kind: input, shape index: {}]
  %s3 = inlined_call_operand.hbm [shape: f32[4,64], index: 3, kind: input, shape index: {}]
  %s4 = inlined_call_operand.vmem [shape: f32[1,64], index: 4, kind: input, shape index: {}]
  %s5 = inlined_call_operand.vmem [shape: f32[1,64], index: 5, kind: input, shape index: {}]
  %s6 = inlined_call_operand.vmem [shape: f32[64,1536], index: 6, kind: input, shape index: {}]
  %s7 = inlined_call_operand.vmem [shape: f32[512,64], index: 7, kind: input, shape index: {}]
  %s8 = inlined_call_operand.hbm [shape: f32[1,64], index: 8, kind: input, shape index: {}]
  %s9 = inlined_call_operand.hbm [shape: f32[1,64], index: 9, kind: input, shape index: {}]
  %s10 = inlined_call_operand.hbm [shape: f32[1,64], index: 10, kind: input, shape index: {}]
  %s11 = inlined_call_operand.hbm [shape: f32[64,64], index: 11, kind: input, shape index: {}]
  %s12 = inlined_call_operand.vmem [shape: f32[1,64], index: 12, kind: input, shape index: {}]
  %s13 = inlined_call_operand.hbm [shape: f32[64,64], index: 13, kind: input, shape index: {}]
  %s14 = inlined_call_operand.vmem [shape: f32[1,64], index: 14, kind: input, shape index: {}]
  %s15 = inlined_call_operand.hbm [shape: f32[2,4,64], index: 15, kind: output, shape index: {}]
  %s16 = sld [smem:[#allocation0]]
  $region121: #{tpu_custom_call.1} parent=0
    _
  %s18 = ssub.s32 1, %s16
  %s19 = scalar_select 0, %s18, %s16
  $region1: #{tpu_custom_call.1} parent=0
    #allocation2 [shape = 'u8[131072]{0}', space=vmem, size = 0x20000, scoped, tag = 'input window, operand 0']
    #allocation3 [shape = 's32[2]{0}', space=sflag, size = 0x8, scoped, tag = 'scoped memory for tpu_custom_call.1']
    #allocation4 [shape = 's32[2]{0}', space=sflag, size = 0x8, scoped, tag = 'scoped memory for tpu_custom_call.1']
    #allocation5 [shape = 'u8[2048]{0}', space=vmem, size = 0x800, scoped, tag = 'input window, operand 3, single buffered']
    #allocation6 [shape = 's32[1]{0}', space=sflag, size = 0x4, scoped, tag = 'scoped memory for tpu_custom_call.1']
    #allocation7 [shape = 'u8[512]{0}', space=vmem, size = 0x400, scoped, tag = 'input window, operand 8, single buffered']
    #allocation8 [shape = 'u8[512]{0}', space=vmem, size = 0x400, scoped, tag = 'input window, operand 9, single buffered']
    #allocation9 [shape = 's32[1]{0}', space=sflag, size = 0x4, scoped, tag = 'scoped memory for tpu_custom_call.1']
    #allocation10 [shape = 'u8[512]{0}', space=vmem, size = 0x400, scoped, tag = 'input window, operand 10, single buffered']
    #allocation11 [shape = 'u8[32768]{0}', space=vmem, size = 0x8000, scoped, tag = 'input window, operand 11, single buffered']
    #allocation12 [shape = 's32[1]{0}', space=sflag, size = 0x4, scoped, tag = 'scoped memory for tpu_custom_call.1']
    #allocation13 [shape = 'u8[32768]{0}', space=vmem, size = 0x8000, scoped, tag = 'input window, operand 13, single buffered']
    #allocation14 [shape = 'u8[4096]{0}', space=vmem, size = 0x1000, scoped, tag = 'output window, operand 0']
    %20 = vsyncpa [#allocation3], 0
    %s21 = scalar_lea.sflag [#allocation3], 1
    %22 = vsyncpa %s21, 0
    %23 = vsyncpa [#allocation6], 0
    %24 = vsyncpa [#allocation9], 0
    %25 = vsyncpa [#allocation12], 0
    %26 = vsyncpa [#allocation4], 0
    %s27 = scalar_lea.sflag [#allocation4], 1
    %28 = vsyncpa %s27, 0
    loop: start=0, step=1, limit=4
    $region2: #{tpu_custom_call.1} parent=1 // loop_pre_header
      _
    $region3: #{tpu_custom_call.1} parent=1 // loop_header
      %s30 = sphi 0, %s34
      %p31 = scmp.ge.s32.totalorder %s30, 4
      %s40 = sphi 0, %s42
      %s43 = sphi 0, %s40
      %s44 = sphi 0, %s43
      %s60 = sphi 0, %s44
      %s64 = sphi 0, %s64
      %s66 = sphi 0, %s64
      %s67 = sphi 0, %s66
      %s81 = sphi 0, %s67
      %s85 = sphi 0, %s85
      %s87 = sphi 0, %s85
      %s88 = sphi 0, %s87
      %s102 = sphi 0, %s88
      %s106 = sphi 0, %s106
      %s108 = sphi 0, %s106
      %s109 = sphi 0, %s108
      %s123 = sphi 0, %s109
      %s127 = sphi 0, %s127
      %s129 = sphi 0, %s127
      %s130 = sphi 0, %s129
      %s144 = sphi 0, %s130
      %s148 = sphi 0, %s148
      %s150 = sphi 0, %s148
      %s151 = sphi 0, %s150
      %s165 = sphi 0, %s151
      %s169 = sphi 0, %s169
      %s171 = sphi 0, %s169
      %s172 = sphi 0, %s171
      %s186 = sphi 0, %s172
      %s190 = sphi 0, %s190
      %s192 = sphi 0, %s190
      %s193 = sphi 0, %s192
      %s207 = sphi 0, %s193
      %s211 = sphi 0, %s211
      %s213 = sphi 0, %s211
      %s214 = sphi 0, %s213
      %s228 = sphi 0, %s214
      %s232 = sphi 0, %s232
      %s234 = sphi 0, %s232
      %s235 = sphi 0, %s234
      %s249 = sphi 0, %s235
      %s253 = sphi 0, %s253
      %s255 = sphi 0, %s253
      %s256 = sphi 0, %s255
      %s270 = sphi 0, %s256
      %s274 = sphi 0, %s274
      %s276 = sphi 0, %s274
      %s277 = sphi 0, %s276
      %s291 = sphi 0, %s277
      %s295 = sphi 0, %s295
      %s297 = sphi 0, %s295
      %s298 = sphi 0, %s297
      %s312 = sphi 0, %s298
      %s316 = sphi 0, %s316
      %s318 = sphi 0, %s316
      %s319 = sphi 0, %s318
      %s333 = sphi 0, %s319
      %s337 = sphi 0, %s337
      %s339 = sphi 0, %s337
      %s340 = sphi 0, %s339
      %s354 = sphi 0, %s340
      %s360 = sphi 0, %s362
      %s363 = sphi 0, %s360
      %s364 = sphi 0, %s363
      %s380 = sphi 0, %s364
    $region4: #{tpu_custom_call.1} parent=1 // loop_header_branch
      %33 = sbr.rel (%p31) target = $region8
    $region5: #{tpu_custom_call.1} parent=1 // loop_body
      %s35 = ssub.s32 %s30, 1
      %s36 = ssub.s32 %s30, 2
      %s37 = sadd.s32 %s30, 1
      %s38 = ssub.s32 %s30, %s37
      %p39 = scmp.eq.s32.totalorder %s38, 0
      %s41 = sadd.s32 %s40, 1
      %s42 = scalar_select %p39, %s40, %s41
      %p45 = pneg %p39
      %p46 = scmp.eq.s32.totalorder %s30, 1
      %p47 = por %p45, %p46
      %p48 = scmp.ne.s32.totalorder %s40, %s43
      %p49 = scmp.eq.s32.totalorder %s30, 0
      %p50 = por %p48, %p49
      %p51 = scmp.ne.s32.totalorder %s40, %s43
      %p52 = scmp.eq.s32.totalorder %s35, 1
      %p53 = por %p51, %p52
      %p54 = scmp.ne.s32.totalorder %s43, %s44
      %p55 = scmp.eq.s32.totalorder %s35, 0
      %p56 = por %p54, %p55
      %p57 = scmp.ne.s32.totalorder %s43, %s44
      %p58 = scmp.eq.s32.totalorder %s36, 1
      %p59 = por %p57, %p58
      %p61 = scmp.ne.s32.totalorder %s44, %s60
      %p62 = scmp.eq.s32.totalorder %s36, 0
      %p63 = por %p61, %p62
      %s65 = sadd.s32 %s64, 1
      %p68 = scmp.eq.s32.totalorder %s30, 1
      %p69 = scmp.ne.s32.totalorder %s64, %s66
      %p70 = scmp.eq.s32.totalorder %s30, 0
      %p71 = por %p69, %p70
      %p72 = scmp.ne.s32.totalorder %s64, %s66
      %p73 = scmp.eq.s32.totalorder %s35, 1
      %p74 = por %p72, %p73
      %p75 = scmp.ne.s32.totalorder %s66, %s67
      %p76 = scmp.eq.s32.totalorder %s35, 0
      %p77 = por %p75, %p76
      %p78 = scmp.ne.s32.totalorder %s66, %s67
      %p79 = scmp.eq.s32.totalorder %s36, 1
      %p80 = por %p78, %p79
      %p82 = scmp.ne.s32.totalorder %s67, %s81
      %p83 = scmp.eq.s32.totalorder %s36, 0
      %p84 = por %p82, %p83
      %s86 = sadd.s32 %s85, 1
      %p89 = scmp.eq.s32.totalorder %s30, 1
      %p90 = scmp.ne.s32.totalorder %s85, %s87
      %p91 = scmp.eq.s32.totalorder %s30, 0
      %p92 = por %p90, %p91
      %p93 = scmp.ne.s32.totalorder %s85, %s87
      %p94 = scmp.eq.s32.totalorder %s35, 1
      %p95 = por %p93, %p94
      %p96 = scmp.ne.s32.totalorder %s87, %s88
      %p97 = scmp.eq.s32.totalorder %s35, 0
      %p98 = por %p96, %p97
      %p99 = scmp.ne.s32.totalorder %s87, %s88
      %p100 = scmp.eq.s32.totalorder %s36, 1
      %p101 = por %p99, %p100
      %p103 = scmp.ne.s32.totalorder %s88, %s102
      %p104 = scmp.eq.s32.totalorder %s36, 0
      %p105 = por %p103, %p104
      %s107 = sadd.s32 %s106, 1
      %p110 = scmp.eq.s32.totalorder %s30, 1
      %p111 = scmp.ne.s32.totalorder %s106, %s108
      %p112 = scmp.eq.s32.totalorder %s30, 0
      %p113 = por %p111, %p112
      %p114 = scmp.ne.s32.totalorder %s106, %s108
      %p115 = scmp.eq.s32.totalorder %s35, 1
      %p116 = por %p114, %p115
      %p117 = scmp.ne.s32.totalorder %s108, %s109
      %p118 = scmp.eq.s32.totalorder %s35, 0
      %p119 = por %p117, %p118
      %p120 = scmp.ne.s32.totalorder %s108, %s109
      %p121 = scmp.eq.s32.totalorder %s36, 1
      %p122 = por %p120, %p121
      %p124 = scmp.ne.s32.totalorder %s109, %s123
      %p125 = scmp.eq.s32.totalorder %s36, 0
      %p126 = por %p124, %p125
      %s128 = sadd.s32 %s127, 1
      %p131 = scmp.eq.s32.totalorder %s30, 1
      %p132 = scmp.ne.s32.totalorder %s127, %s129
      %p133 = scmp.eq.s32.totalorder %s30, 0
      %p134 = por %p132, %p133
      %p135 = scmp.ne.s32.totalorder %s127, %s129
      %p136 = scmp.eq.s32.totalorder %s35, 1
      %p137 = por %p135, %p136
      %p138 = scmp.ne.s32.totalorder %s129, %s130
      %p139 = scmp.eq.s32.totalorder %s35, 0
      %p140 = por %p138, %p139
      %p141 = scmp.ne.s32.totalorder %s129, %s130
      %p142 = scmp.eq.s32.totalorder %s36, 1
      %p143 = por %p141, %p142
      %p145 = scmp.ne.s32.totalorder %s130, %s144
      %p146 = scmp.eq.s32.totalorder %s36, 0
      %p147 = por %p145, %p146
      %s149 = sadd.s32 %s148, 1
      %p152 = scmp.eq.s32.totalorder %s30, 1
      %p153 = scmp.ne.s32.totalorder %s148, %s150
      %p154 = scmp.eq.s32.totalorder %s30, 0
      %p155 = por %p153, %p154
      %p156 = scmp.ne.s32.totalorder %s148, %s150
      %p157 = scmp.eq.s32.totalorder %s35, 1
      %p158 = por %p156, %p157
      %p159 = scmp.ne.s32.totalorder %s150, %s151
      %p160 = scmp.eq.s32.totalorder %s35, 0
      %p161 = por %p159, %p160
      %p162 = scmp.ne.s32.totalorder %s150, %s151
      %p163 = scmp.eq.s32.totalorder %s36, 1
      %p164 = por %p162, %p163
      %p166 = scmp.ne.s32.totalorder %s151, %s165
      %p167 = scmp.eq.s32.totalorder %s36, 0
      %p168 = por %p166, %p167
      %s170 = sadd.s32 %s169, 1
      %p173 = scmp.eq.s32.totalorder %s30, 1
      %p174 = scmp.ne.s32.totalorder %s169, %s171
      %p175 = scmp.eq.s32.totalorder %s30, 0
      %p176 = por %p174, %p175
      %p177 = scmp.ne.s32.totalorder %s169, %s171
      %p178 = scmp.eq.s32.totalorder %s35, 1
      %p179 = por %p177, %p178
      %p180 = scmp.ne.s32.totalorder %s171, %s172
      %p181 = scmp.eq.s32.totalorder %s35, 0
      %p182 = por %p180, %p181
      %p183 = scmp.ne.s32.totalorder %s171, %s172
      %p184 = scmp.eq.s32.totalorder %s36, 1
      %p185 = por %p183, %p184
      %p187 = scmp.ne.s32.totalorder %s172, %s186
      %p188 = scmp.eq.s32.totalorder %s36, 0
      %p189 = por %p187, %p188
      %s191 = sadd.s32 %s190, 1
      %p194 = scmp.eq.s32.totalorder %s30, 1
      %p195 = scmp.ne.s32.totalorder %s190, %s192
      %p196 = scmp.eq.s32.totalorder %s30, 0
      %p197 = por %p195, %p196
      %p198 = scmp.ne.s32.totalorder %s190, %s192
      %p199 = scmp.eq.s32.totalorder %s35, 1
      %p200 = por %p198, %p199
      %p201 = scmp.ne.s32.totalorder %s192, %s193
      %p202 = scmp.eq.s32.totalorder %s35, 0
      %p203 = por %p201, %p202
      %p204 = scmp.ne.s32.totalorder %s192, %s193
      %p205 = scmp.eq.s32.totalorder %s36, 1
      %p206 = por %p204, %p205
      %p208 = scmp.ne.s32.totalorder %s193, %s207
      %p209 = scmp.eq.s32.totalorder %s36, 0
      %p210 = por %p208, %p209
      %s212 = sadd.s32 %s211, 1
      %p215 = scmp.eq.s32.totalorder %s30, 1
      %p216 = scmp.ne.s32.totalorder %s211, %s213
      %p217 = scmp.eq.s32.totalorder %s30, 0
      %p218 = por %p216, %p217
      %p219 = scmp.ne.s32.totalorder %s211, %s213
      %p220 = scmp.eq.s32.totalorder %s35, 1
      %p221 = por %p219, %p220
      %p222 = scmp.ne.s32.totalorder %s213, %s214
      %p223 = scmp.eq.s32.totalorder %s35, 0
      %p224 = por %p222, %p223
      %p225 = scmp.ne.s32.totalorder %s213, %s214
      %p226 = scmp.eq.s32.totalorder %s36, 1
      %p227 = por %p225, %p226
      %p229 = scmp.ne.s32.totalorder %s214, %s228
      %p230 = scmp.eq.s32.totalorder %s36, 0
      %p231 = por %p229, %p230
      %s233 = sadd.s32 %s232, 1
      %p236 = scmp.eq.s32.totalorder %s30, 1
      %p237 = scmp.ne.s32.totalorder %s232, %s234
      %p238 = scmp.eq.s32.totalorder %s30, 0
      %p239 = por %p237, %p238
      %p240 = scmp.ne.s32.totalorder %s232, %s234
      %p241 = scmp.eq.s32.totalorder %s35, 1
      %p242 = por %p240, %p241
      %p243 = scmp.ne.s32.totalorder %s234, %s235
      %p244 = scmp.eq.s32.totalorder %s35, 0
      %p245 = por %p243, %p244
      %p246 = scmp.ne.s32.totalorder %s234, %s235
      %p247 = scmp.eq.s32.totalorder %s36, 1
      %p248 = por %p246, %p247
      %p250 = scmp.ne.s32.totalorder %s235, %s249
      %p251 = scmp.eq.s32.totalorder %s36, 0
      %p252 = por %p250, %p251
      %s254 = sadd.s32 %s253, 1
      %p257 = scmp.eq.s32.totalorder %s30, 1
      %p258 = scmp.ne.s32.totalorder %s253, %s255
      %p259 = scmp.eq.s32.totalorder %s30, 0
      %p260 = por %p258, %p259
      %p261 = scmp.ne.s32.totalorder %s253, %s255
      %p262 = scmp.eq.s32.totalorder %s35, 1
      %p263 = por %p261, %p262
      %p264 = scmp.ne.s32.totalorder %s255, %s256
      %p265 = scmp.eq.s32.totalorder %s35, 0
      %p266 = por %p264, %p265
      %p267 = scmp.ne.s32.totalorder %s255, %s256
      %p268 = scmp.eq.s32.totalorder %s36, 1
      %p269 = por %p267, %p268
      %p271 = scmp.ne.s32.totalorder %s256, %s270
      %p272 = scmp.eq.s32.totalorder %s36, 0
      %p273 = por %p271, %p272
      %s275 = sadd.s32 %s274, 1
      %p278 = scmp.eq.s32.totalorder %s30, 1
      %p279 = scmp.ne.s32.totalorder %s274, %s276
      %p280 = scmp.eq.s32.totalorder %s30, 0
      %p281 = por %p279, %p280
      %p282 = scmp.ne.s32.totalorder %s274, %s276
      %p283 = scmp.eq.s32.totalorder %s35, 1
      %p284 = por %p282, %p283
      %p285 = scmp.ne.s32.totalorder %s276, %s277
      %p286 = scmp.eq.s32.totalorder %s35, 0
      %p287 = por %p285, %p286
      %p288 = scmp.ne.s32.totalorder %s276, %s277
      %p289 = scmp.eq.s32.totalorder %s36, 1
      %p290 = por %p288, %p289
      %p292 = scmp.ne.s32.totalorder %s277, %s291
      %p293 = scmp.eq.s32.totalorder %s36, 0
      %p294 = por %p292, %p293
      %s296 = sadd.s32 %s295, 1
      %p299 = scmp.eq.s32.totalorder %s30, 1
      %p300 = scmp.ne.s32.totalorder %s295, %s297
      %p301 = scmp.eq.s32.totalorder %s30, 0
      %p302 = por %p300, %p301
      %p303 = scmp.ne.s32.totalorder %s295, %s297
      %p304 = scmp.eq.s32.totalorder %s35, 1
      %p305 = por %p303, %p304
      %p306 = scmp.ne.s32.totalorder %s297, %s298
      %p307 = scmp.eq.s32.totalorder %s35, 0
      %p308 = por %p306, %p307
      %p309 = scmp.ne.s32.totalorder %s297, %s298
      %p310 = scmp.eq.s32.totalorder %s36, 1
      %p311 = por %p309, %p310
      %p313 = scmp.ne.s32.totalorder %s298, %s312
      %p314 = scmp.eq.s32.totalorder %s36, 0
      %p315 = por %p313, %p314
      %s317 = sadd.s32 %s316, 1
      %p320 = scmp.eq.s32.totalorder %s30, 1
      %p321 = scmp.ne.s32.totalorder %s316, %s318
      %p322 = scmp.eq.s32.totalorder %s30, 0
      %p323 = por %p321, %p322
      %p324 = scmp.ne.s32.totalorder %s316, %s318
      %p325 = scmp.eq.s32.totalorder %s35, 1
      %p326 = por %p324, %p325
      %p327 = scmp.ne.s32.totalorder %s318, %s319
      %p328 = scmp.eq.s32.totalorder %s35, 0
      %p329 = por %p327, %p328
      %p330 = scmp.ne.s32.totalorder %s318, %s319
      %p331 = scmp.eq.s32.totalorder %s36, 1
      %p332 = por %p330, %p331
      %p334 = scmp.ne.s32.totalorder %s319, %s333
      %p335 = scmp.eq.s32.totalorder %s36, 0
      %p336 = por %p334, %p335
      %s338 = sadd.s32 %s337, 1
      %p341 = scmp.eq.s32.totalorder %s30, 1
      %p342 = scmp.ne.s32.totalorder %s337, %s339
      %p343 = scmp.eq.s32.totalorder %s30, 0
      %p344 = por %p342, %p343
      %p345 = scmp.ne.s32.totalorder %s337, %s339
      %p346 = scmp.eq.s32.totalorder %s35, 1
      %p347 = por %p345, %p346
      %p348 = scmp.ne.s32.totalorder %s339, %s340
      %p349 = scmp.eq.s32.totalorder %s35, 0
      %p350 = por %p348, %p349
      %p351 = scmp.ne.s32.totalorder %s339, %s340
      %p352 = scmp.eq.s32.totalorder %s36, 1
      %p353 = por %p351, %p352
      %p355 = scmp.ne.s32.totalorder %s340, %s354
      %p356 = scmp.eq.s32.totalorder %s36, 0
      %p357 = por %p355, %p356
      %s358 = ssub.s32 %s30, %s37
      %p359 = scmp.eq.s32.totalorder %s358, 0
      %s361 = sadd.s32 %s360, 1
      %s362 = scalar_select %p359, %s360, %s361
      %p365 = pneg %p359
      %p366 = scmp.eq.s32.totalorder %s30, 1
      %p367 = por %p365, %p366
      %p368 = scmp.ne.s32.totalorder %s360, %s363
      %p369 = scmp.eq.s32.totalorder %s30, 0
      %p370 = por %p368, %p369
      %p371 = scmp.ne.s32.totalorder %s360, %s363
      %p372 = scmp.eq.s32.totalorder %s35, 1
      %p373 = por %p371, %p372
      %p374 = scmp.ne.s32.totalorder %s363, %s364
      %p375 = scmp.eq.s32.totalorder %s35, 0
      %p376 = por %p374, %p375
      %p377 = scmp.ne.s32.totalorder %s363, %s364
      %p378 = scmp.eq.s32.totalorder %s36, 1
      %p379 = por %p377, %p378
      %p381 = scmp.ne.s32.totalorder %s364, %s380
      %p382 = scmp.eq.s32.totalorder %s36, 0
      %p383 = por %p381, %p382
      %p384 = scmp.le.s32.totalorder 1, %s30
      %p385 = scmp.lt.s32.totalorder %s30, 3
      %p386 = pnand %p384, %p385
      %p387 = pneg %p386
      // Predicated region
      $region9: #{tpu_custom_call.1} parent=5 // pred_check
        _
      $region10: #{tpu_custom_call.1} parent=5 // pred_check_branch
        %389 = sbr.rel (%p386) target = $region12
      $region11: #{tpu_custom_call.1} parent=5 // pred_region
        %s390 = ssub.s32 %s30, 1
        // Predicated region
        $region13: #{tpu_custom_call.1} parent=11 // pred_check
          %p391 = pneg %p77
        $region14: #{tpu_custom_call.1} parent=11 // pred_check_branch
          %393 = sbr.rel (%p391) target = $region16
        $region15: #{tpu_custom_call.1} parent=11 // pred_region
          _
        $region16: #{tpu_custom_call.1} parent=11 // pred_fallthru
          _
        // Predicated region
        $region17: #{tpu_custom_call.1} parent=11 // pred_check
          %p394 = pneg %p98
        $region18: #{tpu_custom_call.1} parent=11 // pred_check_branch
          %396 = sbr.rel (%p394) target = $region20
        $region19: #{tpu_custom_call.1} parent=11 // pred_region
          _
        $region20: #{tpu_custom_call.1} parent=11 // pred_fallthru
          _
        // Predicated region
        $region21: #{tpu_custom_call.1} parent=11 // pred_check
          %p397 = pneg %p119
        $region22: #{tpu_custom_call.1} parent=11 // pred_check_branch
          %399 = sbr.rel (%p397) target = $region24
        $region23: #{tpu_custom_call.1} parent=11 // pred_region
          %401 = vsyncadd [#allocation6], 0
          %s403 = sshll.u32 %s3, 4
          %s404 = int_to_ptr.hbm [resolvable:$true] %s403
          %s405 = sshll.u32 [#allocation5], 4
          %s406 = int_to_ptr.vmem [resolvable:$true] %s405
          %408 = dma.hbm_to_vmem [thread:$0]  %s404, 64, %s406, [#allocation6]
        $region24: #{tpu_custom_call.1} parent=11 // pred_fallthru
          _
        // Predicated region
        $region25: #{tpu_custom_call.1} parent=11 // pred_check
          %p409 = pneg %p140
        $region26: #{tpu_custom_call.1} parent=11 // pred_check_branch
          %411 = sbr.rel (%p409) target = $region28
        $region27: #{tpu_custom_call.1} parent=11 // pred_region
          _
        $region28: #{tpu_custom_call.1} parent=11 // pred_fallthru
          _
        // Predicated region
        $region29: #{tpu_custom_call.1} parent=11 // pred_check
          %p412 = pneg %p161
        $region30: #{tpu_custom_call.1} parent=11 // pred_check_branch
          %414 = sbr.rel (%p412) target = $region32
        $region31: #{tpu_custom_call.1} parent=11 // pred_region
          _
        $region32: #{tpu_custom_call.1} parent=11 // pred_fallthru
          _
        // Predicated region
        $region33: #{tpu_custom_call.1} parent=11 // pred_check
          %p415 = pneg %p182
        $region34: #{tpu_custom_call.1} parent=11 // pred_check_branch
          %417 = sbr.rel (%p415) target = $region36
        $region35: #{tpu_custom_call.1} parent=11 // pred_region
          _
        $region36: #{tpu_custom_call.1} parent=11 // pred_fallthru
          _
        // Predicated region
        $region37: #{tpu_custom_call.1} parent=11 // pred_check
          %p418 = pneg %p203
        $region38: #{tpu_custom_call.1} parent=11 // pred_check_branch
          %420 = sbr.rel (%p418) target = $region40
        $region39: #{tpu_custom_call.1} parent=11 // pred_region
          _
        $region40: #{tpu_custom_call.1} parent=11 // pred_fallthru
          _
        // Predicated region
        $region41: #{tpu_custom_call.1} parent=11 // pred_check
          %p421 = pneg %p224
        $region42: #{tpu_custom_call.1} parent=11 // pred_check_branch
          %423 = sbr.rel (%p421) target = $region44
        $region43: #{tpu_custom_call.1} parent=11 // pred_region
          %425 = vsyncadd [#allocation6], 0
          %s427 = sshll.u32 %s8, 4
          %s428 = int_to_ptr.hbm [resolvable:$true] %s427
          %s429 = sshll.u32 [#allocation7], 4
          %s430 = int_to_ptr.vmem [resolvable:$true] %s429
          %432 = dma.hbm_to_vmem [thread:$0]  %s428, 16, %s430, [#allocation6]
        $region44: #{tpu_custom_call.1} parent=11 // pred_fallthru
          _
        // Predicated region
        $region45: #{tpu_custom_call.1} parent=11 // pred_check
          %p433 = pneg %p245
        $region46: #{tpu_custom_call.1} parent=11 // pred_check_branch
          %435 = sbr.rel (%p433) target = $region48
        $region47: #{tpu_custom_call.1} parent=11 // pred_region
          %437 = vsyncadd [#allocation9], 0
          %s439 = sshll.u32 %s9, 4
          %s440 = int_to_ptr.hbm [resolvable:$true] %s439
          %s441 = sshll.u32 [#allocation8], 4
          %s442 = int_to_ptr.vmem [resolvable:$true] %s441
          %444 = dma.hbm_to_vmem [thread:$0]  %s440, 16, %s442, [#allocation9]
        $region48: #{tpu_custom_call.1} parent=11 // pred_fallthru
          _
        // Predicated region
        $region49: #{tpu_custom_call.1} parent=11 // pred_check
          %p445 = pneg %p266
        $region50: #{tpu_custom_call.1} parent=11 // pred_check_branch
          %447 = sbr.rel (%p445) target = $region52
        $region51: #{tpu_custom_call.1} parent=11 // pred_region
          %449 = vsyncadd [#allocation9], 0
          %s451 = sshll.u32 %s10, 4
          %s452 = int_to_ptr.hbm [resolvable:$true] %s451
          %s453 = sshll.u32 [#allocation10], 4
          %s454 = int_to_ptr.vmem [resolvable:$true] %s453
          %456 = dma.hbm_to_vmem [thread:$0]  %s452, 16, %s454, [#allocation9]
        $region52: #{tpu_custom_call.1} parent=11 // pred_fallthru
          _
        // Predicated region
        $region53: #{tpu_custom_call.1} parent=11 // pred_check
          %p457 = pneg %p287
        $region54: #{tpu_custom_call.1} parent=11 // pred_check_branch
          %459 = sbr.rel (%p457) target = $region56
        $region55: #{tpu_custom_call.1} parent=11 // pred_region
          %461 = vsyncadd [#allocation12], 0
          %s462 = sshll.u32 %s11, 4
          %s463 = int_to_ptr.hbm [resolvable:$true] %s462
          %s464 = sshll.u32 [#allocation11], 4
          %s465 = int_to_ptr.vmem [resolvable:$true] %s464
          %470 = dma.hbm_to_vmem [thread:$0]  %s463, 1024, %s465, [#allocation12], 128, 128, 8
        $region56: #{tpu_custom_call.1} parent=11 // pred_fallthru
          _
        // Predicated region
        $region57: #{tpu_custom_call.1} parent=11 // pred_check
          %p471 = pneg %p308
        $region58: #{tpu_custom_call.1} parent=11 // pred_check_branch
          %473 = sbr.rel (%p471) target = $region60
        $region59: #{tpu_custom_call.1} parent=11 // pred_region
          _
        $region60: #{tpu_custom_call.1} parent=11 // pred_fallthru
          _
        // Predicated region
        $region61: #{tpu_custom_call.1} parent=11 // pred_check
          %p474 = pneg %p329
        $region62: #{tpu_custom_call.1} parent=11 // pred_check_branch
          %476 = sbr.rel (%p474) target = $region64
        $region63: #{tpu_custom_call.1} parent=11 // pred_region
          %478 = vsyncadd [#allocation12], 0
          %s479 = sshll.u32 %s13, 4
          %s480 = int_to_ptr.hbm [resolvable:$true] %s479
          %s481 = sshll.u32 [#allocation13], 4
          %s482 = int_to_ptr.vmem [resolvable:$true] %s481
          %487 = dma.hbm_to_vmem [thread:$0]  %s480, 1024, %s482, [#allocation12], 128, 128, 8
        $region64: #{tpu_custom_call.1} parent=11 // pred_fallthru
          _
        // Predicated region
        $region65: #{tpu_custom_call.1} parent=11 // pred_check
          %p488 = pneg %p350
        $region66: #{tpu_custom_call.1} parent=11 // pred_check_branch
          %490 = sbr.rel (%p488) target = $region68
        $region67: #{tpu_custom_call.1} parent=11 // pred_region
          _
        $region68: #{tpu_custom_call.1} parent=11 // pred_fallthru
          _
      $region12: #{tpu_custom_call.1} parent=5 // pred_fallthru
        _
      %p491 = scmp.lt.s32.totalorder %s30, 2
      // Predicated region
      $region69: #{tpu_custom_call.1} parent=5 // pred_check
        %p492 = pneg %p491
      $region70: #{tpu_custom_call.1} parent=5 // pred_check_branch
        %494 = sbr.rel (%p492) target = $region72
      $region71: #{tpu_custom_call.1} parent=5 // pred_region
        // Predicated region
        $region73: #{tpu_custom_call.1} parent=71 // pred_check
          %p495 = pneg %p50
        $region74: #{tpu_custom_call.1} parent=71 // pred_check_branch
          %497 = sbr.rel (%p495) target = $region76
        $region75: #{tpu_custom_call.1} parent=71 // pred_region
          %s498 = sand.u32 %s40, 1
          %s499 = scalar_lea.sflag [#allocation3], %s498
          %s500 = sand.u32 %s40, 1
          %s501 = smul.addr %s500, 128
          %s502 = scalar_lea.vmem [#allocation2], %s501
          %504 = vsyncadd %s499, 0
          %s505 = smul.addr %s30, 16
          %s506 = smul.addr %s505, 8
          %s507 = scalar_lea.hbm %s0, %s506
          %s508 = sshll.u32 %s507, 4
          %s509 = int_to_ptr.hbm [resolvable:$true] %s508
          %s510 = sshll.u32 %s502, 4
          %s511 = int_to_ptr.vmem [resolvable:$true] %s510
          %516 = dma.hbm_to_vmem [thread:$0]  %s509, 2048, %s511, %s499, 256, 256, 16
        $region76: #{tpu_custom_call.1} parent=71 // pred_fallthru
          _
      $region72: #{tpu_custom_call.1} parent=5 // pred_fallthru
        _
      %p517 = scmp.le.s32.totalorder 1, %s30
      %p518 = scmp.lt.s32.totalorder %s30, 3
      %p519 = pnand %p517, %p518
      %p520 = pneg %p519
      // Predicated region
      $region77: #{tpu_custom_call.1} parent=5 // pred_check
        _
      $region78: #{tpu_custom_call.1} parent=5 // pred_check_branch
        %522 = sbr.rel (%p519) target = $region80
      $region79: #{tpu_custom_call.1} parent=5 // pred_region
        %s523 = ssub.s32 %s30, 1
        %s524 = sand.u32 %s43, 1
        %s525 = scalar_lea.sflag [#allocation3], %s524
        %s526 = sand.u32 %s43, 1
        %s527 = smul.addr %s526, 128
        %s528 = scalar_lea.vmem [#allocation2], %s527
        // Predicated region
        $region81: #{tpu_custom_call.1} parent=79 // pred_check
          %p529 = pneg %p56
        $region82: #{tpu_custom_call.1} parent=79 // pred_check_branch
          %531 = sbr.rel (%p529) target = $region84
        $region83: #{tpu_custom_call.1} parent=79 // pred_region
          %533 = dma.done %s525, 2048
        $region84: #{tpu_custom_call.1} parent=79 // pred_fallthru
          _
        // Predicated region
        $region85: #{tpu_custom_call.1} parent=79 // pred_check
          %p534 = pneg %p119
        $region86: #{tpu_custom_call.1} parent=79 // pred_check_branch
          %536 = sbr.rel (%p534) target = $region88
        $region87: #{tpu_custom_call.1} parent=79 // pred_region
          %538 = dma.done [#allocation6], 64
        $region88: #{tpu_custom_call.1} parent=79 // pred_fallthru
          _
        // Predicated region
        $region89: #{tpu_custom_call.1} parent=79 // pred_check
          %p539 = pneg %p224
        $region90: #{tpu_custom_call.1} parent=79 // pred_check_branch
          %541 = sbr.rel (%p539) target = $region92
        $region91: #{tpu_custom_call.1} parent=79 // pred_region
          %543 = dma.done [#allocation6], 16
        $region92: #{tpu_custom_call.1} parent=79 // pred_fallthru
          _
        // Predicated region
        $region93: #{tpu_custom_call.1} parent=79 // pred_check
          %p544 = pneg %p245
        $region94: #{tpu_custom_call.1} parent=79 // pred_check_branch
          %546 = sbr.rel (%p544) target = $region96
        $region95: #{tpu_custom_call.1} parent=79 // pred_region
          %548 = dma.done [#allocation9], 16
        $region96: #{tpu_custom_call.1} parent=79 // pred_fallthru
          _
        // Predicated region
        $region97: #{tpu_custom_call.1} parent=79 // pred_check
          %p549 = pneg %p266
        $region98: #{tpu_custom_call.1} parent=79 // pred_check_branch
          %551 = sbr.rel (%p549) target = $region100
        $region99: #{tpu_custom_call.1} parent=79 // pred_region
          %553 = dma.done [#allocation9], 16
        $region100: #{tpu_custom_call.1} parent=79 // pred_fallthru
          _
        // Predicated region
        $region101: #{tpu_custom_call.1} parent=79 // pred_check
          %p554 = pneg %p287
        $region102: #{tpu_custom_call.1} parent=79 // pred_check_branch
          %556 = sbr.rel (%p554) target = $region104
        $region103: #{tpu_custom_call.1} parent=79 // pred_region
          %558 = dma.done [#allocation12], 1024
        $region104: #{tpu_custom_call.1} parent=79 // pred_fallthru
          _
        // Predicated region
        $region105: #{tpu_custom_call.1} parent=79 // pred_check
          %p559 = pneg %p329
        $region106: #{tpu_custom_call.1} parent=79 // pred_check_branch
          %561 = sbr.rel (%p559) target = $region108
        $region107: #{tpu_custom_call.1} parent=79 // pred_region
          %563 = dma.done [#allocation12], 1024
        $region108: #{tpu_custom_call.1} parent=79 // pred_fallthru
          _
        %s564 = sand.u32 %s43, 1
        %s565 = scalar_lea.sflag [#allocation3], %s564
        %s566 = sand.u32 %s43, 1
        %s567 = smul.addr %s566, 128
        %s568 = scalar_lea.vmem [#allocation2], %s567
        %p569 = pneg %p56
        %p570 = pneg %p53
        %p571 = pneg %p77
        %p572 = pneg %p74
        %p573 = pneg %p98
        %p574 = pneg %p95
        %p575 = pneg %p119
        %p576 = pneg %p116
        %p577 = pneg %p140
        %p578 = pneg %p137
        %p579 = pneg %p161
        %p580 = pneg %p158
        %p581 = pneg %p182
        %p582 = pneg %p179
        %p583 = pneg %p203
        %p584 = pneg %p200
        %p585 = pneg %p224
        %p586 = pneg %p221
        %p587 = pneg %p245
        %p588 = pneg %p242
        %p589 = pneg %p266
        %p590 = pneg %p263
        %p591 = pneg %p287
        %p592 = pneg %p284
        %p593 = pneg %p308
        %p594 = pneg %p305
        %p595 = pneg %p329
        %p596 = pneg %p326
        %p597 = pneg %p350
        %p598 = pneg %p347
        %p599 = pneg %p376
        %p600 = pneg %p373
        %s601 = sand.u32 %s363, 1
        %s602 = scalar_lea.sflag [#allocation4], %s601
        %s603 = sand.u32 %s363, 1
        %s604 = smul.addr %s603, 4
        %s605 = scalar_lea.vmem [#allocation14], %s604
        %v606 = vld [vmem:[%s528] sm:$0xff]
        %v607 = vld [vmem:[%s528 + $0x8] sm:$0xff]
        %v608 = vld [vmem:[%s528 + $0x10] sm:$0xff]
        %v609 = vld [vmem:[%s528 + $0x18] sm:$0xff]
        %v610 = vld [vmem:[%s528 + $0x20] sm:$0xff]
        %v611 = vld [vmem:[%s528 + $0x28] sm:$0xff]
        %v612 = vld [vmem:[%s528 + $0x30] sm:$0xff]
        %v613 = vld [vmem:[%s528 + $0x38] sm:$0xff]
        %v614 = vld [vmem:[%s528 + $0x40] sm:$0xff]
        %v615 = vld [vmem:[%s528 + $0x48] sm:$0xff]
        %v616 = vld [vmem:[%s528 + $0x50] sm:$0xff]
        %v617 = vld [vmem:[%s528 + $0x58] sm:$0xff]
        %v618 = vld [vmem:[%s528 + $0x60] sm:$0xff]
        %v619 = vld [vmem:[%s528 + $0x68] sm:$0xff]
        %v620 = vld [vmem:[%s528 + $0x70] sm:$0xff]
        %v621 = vld [vmem:[%s528 + $0x78] sm:$0xff]
        %v622 = vld [vmem:[%s1] sm:$0xf]
        %v623 = vld [vmem:[%s2] sm:$0xf]
        %625 = vset.pattern.permute.xlu0 0
        %626 = vperm.xlu0 %625, %v623
        %v627 = vpop.permute.xlu0 %626
        %vm629 = vcmask 523264
        %v631 = vsel %vm629, %v622, 0
        %633 = vmatpush.msra.mxu0 0.0
        %634 = vmatpush.msra.mxu0 0.0
        %635 = vmatpush.msra.mxu0 0.0
        %636 = vmatpush.msra.mxu0 0.0
        %637 = vmatpush.msra.mxu0 0.0
        %638 = vmatpush.msra.mxu0 0.0
        %639 = vmatpush.msra.mxu0 0.0
        %640 = vmatpush.msra.mxu0 0.0
        %641 = vmatpush.msra.mxu0 %v620
        %642 = vmatpush.msra.mxu0 %v618
        %643 = vmatpush.msra.mxu0 %v616
        %644 = vmatpush.msra.mxu0 %v614
        %645 = vmatpush.msra.mxu0 %v612
        %646 = vmatpush.msra.mxu0 %v610
        %647 = vmatpush.msra.mxu0 %v608
        %648 = vmatpush.msra.mxu0 %v606
        %649 = vmatmul.f32.gmra.mxu0 %v631
        %v650 = vpop.f32.mrf.mxu0
        %v651 = vadd.f32 %v627, %v650
        %652 = vdwg.mxu0
        %653 = vmatpush.msra.mxu0 0.0
        %654 = vmatpush.msra.mxu0 0.0
        %655 = vmatpush.msra.mxu0 0.0
        %656 = vmatpush.msra.mxu0 0.0
        %657 = vmatpush.msra.mxu0 0.0
        %658 = vmatpush.msra.mxu0 0.0
        %659 = vmatpush.msra.mxu0 0.0
        %660 = vmatpush.msra.mxu0 0.0
        %661 = vmatpush.msra.mxu0 %v621
        %662 = vmatpush.msra.mxu0 %v619
        %663 = vmatpush.msra.mxu0 %v617
        %664 = vmatpush.msra.mxu0 %v615
        %665 = vmatpush.msra.mxu0 %v613
        %666 = vmatpush.msra.mxu0 %v611
        %667 = vmatpush.msra.mxu0 %v609
        %668 = vmatpush.msra.mxu0 %v607
        %669 = vmatmul.f32.gmra.mxu0 %v631
        %v670 = vpop.f32.mrf.mxu0
        %v671 = vadd.f32 %v627, %v670
        %672 = vdwg.mxu0
        %vm673 = vcmask 1043456
        %v674 = vsel %vm673, %v651, -inf
        %v675 = vsel %vm673, %v671, -inf
        %v676 = vmax.f32 %v674, %v675
        %677 = vmax.xlane.f32.xlu0 %v676
        %v678 = vpop.xlane.xlu0 %677
        %v679 = vsub.f32 %v651, %v678
        %v680 = vsub.f32 %v671, %v678
        %v681 = vmul.f32 %v679, 1.442695
        %v682 = vpow.pop %v681
        %v683 = vmul.f32 %v680, 1.442695
        %v684 = vpow.pop %v683
        %v685 = vsel %vm673, %v682, 0.0
        %v686 = vsel %vm673, %v684, 0.0
        %v687 = vadd.f32 %v685, %v686
        %688 = vadd.xlane.f32.xlu0 %v687
        %v689 = vpop.xlane.xlu0 %688
        %690 = vmatpush.xpose.msra.mxu0 0.0
        %691 = vmatpush.xpose.msra.mxu0 0.0
        %692 = vmatpush.xpose.msra.mxu0 0.0
        %693 = vmatpush.xpose.msra.mxu0 0.0
        %694 = vmatpush.xpose.msra.mxu0 0.0
        %695 = vmatpush.xpose.msra.mxu0 0.0
        %696 = vmatpush.xpose.msra.mxu0 0.0
        %697 = vmatpush.xpose.msra.mxu0 0.0
        %698 = vmatpush.xpose.msra.mxu0 %v620
        %699 = vmatpush.xpose.msra.mxu0 %v618
        %700 = vmatpush.xpose.msra.mxu0 %v616
        %701 = vmatpush.xpose.msra.mxu0 %v614
        %702 = vmatpush.xpose.msra.mxu0 %v612
        %703 = vmatpush.xpose.msra.mxu0 %v610
        %704 = vmatpush.xpose.msra.mxu0 %v608
        %705 = vmatpush.xpose.msra.mxu0 %v606
        %706 = vmatmul.f32.gmra.mxu0 %v682
        %v707 = vpop.f32.mrf.mxu0
        %v708 = vadd.f32 0.0, %v707
        %709 = vdwg.mxu0
        %710 = vmatpush.xpose.msra.mxu0 0.0
        %711 = vmatpush.xpose.msra.mxu0 0.0
        %712 = vmatpush.xpose.msra.mxu0 0.0
        %713 = vmatpush.xpose.msra.mxu0 0.0
        %714 = vmatpush.xpose.msra.mxu0 0.0
        %715 = vmatpush.xpose.msra.mxu0 0.0
        %716 = vmatpush.xpose.msra.mxu0 0.0
        %717 = vmatpush.xpose.msra.mxu0 0.0
        %718 = vmatpush.xpose.msra.mxu0 %v621
        %719 = vmatpush.xpose.msra.mxu0 %v619
        %720 = vmatpush.xpose.msra.mxu0 %v617
        %721 = vmatpush.xpose.msra.mxu0 %v615
        %722 = vmatpush.xpose.msra.mxu0 %v613
        %723 = vmatpush.xpose.msra.mxu0 %v611
        %724 = vmatpush.xpose.msra.mxu0 %v609
        %725 = vmatpush.xpose.msra.mxu0 %v607
        %726 = vmatmul.f32.gmra.mxu0 %v684
        %v727 = vpop.f32.mrf.mxu0
        %v728 = vadd.f32 %v708, %v727
        %729 = vdwg.mxu0
        %v730 = vrcp.pop %v689
        %v731 = vmul.f32 %v689, %v730
        %v732 = vsub.f32 1.0, %v731
        %v733 = vmul.f32 %v730, %v732
        %v734 = vadd.f32 %v730, %v733
        %vm735 = vweird.f32 %v689
        %vm736 = vweird.f32 %v730
        %vm737 = vmor %vm735, %vm736
        %v738 = vsel %vm737, %v730, %v734
        %v739 = vand.u32 2147483647, %v689
        %vm740 = vcmp.eq.f32.partialorder %v739, 8.507059e+37
        %v741 = vand.u32 %v689, 2147483648
        %v742 = vor.u32 1.1754944e-38, %v741
        %v743 = vsel %vm740, %v742, %v738
        %v744 = vmul.f32 %v728, %v743
        %v745 = vld [vmem:[#allocation5] sm:$0xf]
        %v746 = vadd.f32 %v744, %v745
        %v747 = vld [vmem:[%s4] sm:$0x1]
        %v748 = vld [vmem:[%s5] sm:$0x1]
        %vm749 = vcmask 519168
        %v750 = vsel %vm749, %v746, 0.0
        %751 = vadd.xlane.f32.xlu0 %v750
        %v752 = vpop.xlane.xlu0 %751
        %v753 = vrcp.pop 64.0
        %v754 = vmul.f32 64.0, %v753
        %v755 = vsub.f32 1.0, %v754
        %v756 = vmul.f32 %v753, %v755
        %v757 = vadd.f32 %v753, %v756
        %vm758 = vweird.f32 %v753
        %v759 = vsel %vm758, %v753, %v757
        %v760 = vmul.f32 %v752, %v759
        %v761 = vsub.f32 %v746, %v760
        %v762 = vmul.f32 %v761, %v761
        %v763 = vsel %vm749, %v762, 0.0
        %764 = vadd.xlane.f32.xlu0 %v763
        %v765 = vpop.xlane.xlu0 %764
        %v766 = vmul.f32 %v765, %v759
        %v767 = vadd.f32 %v766, 1e-05
        %v768 = vrsqrt.pop %v767
        %v769 = vmul.f32 %v768, %v767
        %v770 = vmul.f32 %v769, %v768
        %v771 = vmul.f32 0.5, %v770
        %v772 = vsub.f32 1.5, %v771
        %v773 = vmul.f32 %v768, %v772
        %vm774 = vweird.f32 %v767
        %vm775 = vweird.f32 %v768
        %vm776 = vmor %vm774, %vm775
        %v777 = vsel %vm776, %v768, %v773
        %v778 = vmul.f32 %v761, %v777
        %v780 = vperm.slane %v747, 0
        %v782 = vmul.f32 %v778, %v780
        %v784 = vperm.slane %v748, 0
        %v786 = vadd.f32 %v782, %v784
        %v787 = vld [vmem:[%s6] sm:$0xff]
        %v788 = vld [vmem:[%s6 + $0x8] sm:$0xff]
        %v789 = vld [vmem:[%s6 + $0x10] sm:$0xff]
        %v790 = vld [vmem:[%s6 + $0x18] sm:$0xff]
        %v791 = vld [vmem:[%s6 + $0x20] sm:$0xff]
        %v792 = vld [vmem:[%s6 + $0x28] sm:$0xff]
        %v793 = vld [vmem:[%s6 + $0x30] sm:$0xff]
        %v794 = vld [vmem:[%s6 + $0x38] sm:$0xff]
        %v795 = vld [vmem:[%s6 + $0x40] sm:$0xff]
        %v796 = vld [vmem:[%s6 + $0x48] sm:$0xff]
        %v797 = vld [vmem:[%s6 + $0x50] sm:$0xff]
        %v798 = vld [vmem:[%s6 + $0x58] sm:$0xff]
        %v799 = vld [vmem:[%s6 + $0x60] sm:$0xff]
        %v800 = vld [vmem:[%s6 + $0x68] sm:$0xff]
        %v801 = vld [vmem:[%s6 + $0x70] sm:$0xff]
        %v802 = vld [vmem:[%s6 + $0x78] sm:$0xff]
        %v803 = vld [vmem:[%s6 + $0x80] sm:$0xff]
        %v804 = vld [vmem:[%s6 + $0x88] sm:$0xff]
        %v805 = vld [vmem:[%s6 + $0x90] sm:$0xff]
        %v806 = vld [vmem:[%s6 + $0x98] sm:$0xff]
        %v807 = vld [vmem:[%s6 + $0xa0] sm:$0xff]
        %v808 = vld [vmem:[%s6 + $0xa8] sm:$0xff]
        %v809 = vld [vmem:[%s6 + $0xb0] sm:$0xff]
        %v810 = vld [vmem:[%s6 + $0xb8] sm:$0xff]
        %v811 = vld [vmem:[%s6 + $0xc0] sm:$0xff]
        %v812 = vld [vmem:[%s6 + $0xc8] sm:$0xff]
        %v813 = vld [vmem:[%s6 + $0xd0] sm:$0xff]
        %v814 = vld [vmem:[%s6 + $0xd8] sm:$0xff]
        %v815 = vld [vmem:[%s6 + $0xe0] sm:$0xff]
        %v816 = vld [vmem:[%s6 + $0xe8] sm:$0xff]
        %v817 = vld [vmem:[%s6 + $0xf0] sm:$0xff]
        %v818 = vld [vmem:[%s6 + $0xf8] sm:$0xff]
        %v819 = vld [vmem:[%s6 + $0x100] sm:$0xff]
        %v820 = vld [vmem:[%s6 + $0x108] sm:$0xff]
        %v821 = vld [vmem:[%s6 + $0x110] sm:$0xff]
        %v822 = vld [vmem:[%s6 + $0x118] sm:$0xff]
        %v823 = vld [vmem:[%s6 + $0x120] sm:$0xff]
        %v824 = vld [vmem:[%s6 + $0x128] sm:$0xff]
        %v825 = vld [vmem:[%s6 + $0x130] sm:$0xff]
        %v826 = vld [vmem:[%s6 + $0x138] sm:$0xff]
        %v827 = vld [vmem:[%s6 + $0x140] sm:$0xff]
        %v828 = vld [vmem:[%s6 + $0x148] sm:$0xff]
        %v829 = vld [vmem:[%s6 + $0x150] sm:$0xff]
        %v830 = vld [vmem:[%s6 + $0x158] sm:$0xff]
        %v831 = vld [vmem:[%s6 + $0x160] sm:$0xff]
        %v832 = vld [vmem:[%s6 + $0x168] sm:$0xff]
        %v833 = vld [vmem:[%s6 + $0x170] sm:$0xff]
        %v834 = vld [vmem:[%s6 + $0x178] sm:$0xff]
        %v835 = vld [vmem:[%s6 + $0x180] sm:$0xff]
        %v836 = vld [vmem:[%s6 + $0x188] sm:$0xff]
        %v837 = vld [vmem:[%s6 + $0x190] sm:$0xff]
        %v838 = vld [vmem:[%s6 + $0x198] sm:$0xff]
        %v839 = vld [vmem:[%s6 + $0x1a0] sm:$0xff]
        %v840 = vld [vmem:[%s6 + $0x1a8] sm:$0xff]
        %v841 = vld [vmem:[%s6 + $0x1b0] sm:$0xff]
        %v842 = vld [vmem:[%s6 + $0x1b8] sm:$0xff]
        %v843 = vld [vmem:[%s6 + $0x1c0] sm:$0xff]
        %v844 = vld [vmem:[%s6 + $0x1c8] sm:$0xff]
        %v845 = vld [vmem:[%s6 + $0x1d0] sm:$0xff]
        %v846 = vld [vmem:[%s6 + $0x1d8] sm:$0xff]
        %v847 = vld [vmem:[%s6 + $0x1e0] sm:$0xff]
        %v848 = vld [vmem:[%s6 + $0x1e8] sm:$0xff]
        %v849 = vld [vmem:[%s6 + $0x1f0] sm:$0xff]
        %v850 = vld [vmem:[%s6 + $0x1f8] sm:$0xff]
        %v851 = vld [vmem:[%s6 + $0x200] sm:$0xff]
        %v852 = vld [vmem:[%s6 + $0x208] sm:$0xff]
        %v853 = vld [vmem:[%s6 + $0x210] sm:$0xff]
        %v854 = vld [vmem:[%s6 + $0x218] sm:$0xff]
        %v855 = vld [vmem:[%s6 + $0x220] sm:$0xff]
        %v856 = vld [vmem:[%s6 + $0x228] sm:$0xff]
        %v857 = vld [vmem:[%s6 + $0x230] sm:$0xff]
        %v858 = vld [vmem:[%s6 + $0x238] sm:$0xff]
        %v859 = vld [vmem:[%s6 + $0x240] sm:$0xff]
        %v860 = vld [vmem:[%s6 + $0x248] sm:$0xff]
        %v861 = vld [vmem:[%s6 + $0x250] sm:$0xff]
        %v862 = vld [vmem:[%s6 + $0x258] sm:$0xff]
        %v863 = vld [vmem:[%s6 + $0x260] sm:$0xff]
        %v864 = vld [vmem:[%s6 + $0x268] sm:$0xff]
        %v865 = vld [vmem:[%s6 + $0x270] sm:$0xff]
        %v866 = vld [vmem:[%s6 + $0x278] sm:$0xff]
        %v867 = vld [vmem:[%s6 + $0x280] sm:$0xff]
        %v868 = vld [vmem:[%s6 + $0x288] sm:$0xff]
        %v869 = vld [vmem:[%s6 + $0x290] sm:$0xff]
        %v870 = vld [vmem:[%s6 + $0x298] sm:$0xff]
        %v871 = vld [vmem:[%s6 + $0x2a0] sm:$0xff]
        %v872 = vld [vmem:[%s6 + $0x2a8] sm:$0xff]
        %v873 = vld [vmem:[%s6 + $0x2b0] sm:$0xff]
        %v874 = vld [vmem:[%s6 + $0x2b8] sm:$0xff]
        %v875 = vld [vmem:[%s6 + $0x2c0] sm:$0xff]
        %v876 = vld [vmem:[%s6 + $0x2c8] sm:$0xff]
        %v877 = vld [vmem:[%s6 + $0x2d0] sm:$0xff]
        %v878 = vld [vmem:[%s6 + $0x2d8] sm:$0xff]
        %v879 = vld [vmem:[%s6 + $0x2e0] sm:$0xff]
        %v880 = vld [vmem:[%s6 + $0x2e8] sm:$0xff]
        %v881 = vld [vmem:[%s6 + $0x2f0] sm:$0xff]
        %v882 = vld [vmem:[%s6 + $0x2f8] sm:$0xff]
        %v884 = vsel %vm629, %v786, 0
        %886 = vmatpush.msra.mxu0 0.0
        %887 = vmatpush.msra.mxu0 0.0
        %888 = vmatpush.msra.mxu0 0.0
        %889 = vmatpush.msra.mxu0 0.0
        %890 = vmatpush.msra.mxu0 0.0
        %891 = vmatpush.msra.mxu0 0.0
        %892 = vmatpush.msra.mxu0 0.0
        %893 = vmatpush.msra.mxu0 0.0
        %894 = vmatpush.msra.mxu0 %v871
        %895 = vmatpush.msra.mxu0 %v859
        %896 = vmatpush.msra.mxu0 %v847
        %897 = vmatpush.msra.mxu0 %v835
        %898 = vmatpush.msra.mxu0 %v823
        %899 = vmatpush.msra.mxu0 %v811
        %900 = vmatpush.msra.mxu0 %v799
        %901 = vmatpush.msra.mxu0 %v787
        %902 = vmatmul.f32.gmra.mxu0 %v884
        %v903 = vpop.f32.mrf.mxu0
        %v904 = vadd.f32 0.0, %v903
        %905 = vdwg.mxu0
        %906 = vmatpush.msra.mxu0 0.0
        %907 = vmatpush.msra.mxu0 0.0
        %908 = vmatpush.msra.mxu0 0.0
        %909 = vmatpush.msra.mxu0 0.0
        %910 = vmatpush.msra.mxu0 0.0
        %911 = vmatpush.msra.mxu0 0.0
        %912 = vmatpush.msra.mxu0 0.0
        %913 = vmatpush.msra.mxu0 0.0
        %914 = vmatpush.msra.mxu0 %v872
        %915 = vmatpush.msra.mxu0 %v860
        %916 = vmatpush.msra.mxu0 %v848
        %917 = vmatpush.msra.mxu0 %v836
        %918 = vmatpush.msra.mxu0 %v824
        %919 = vmatpush.msra.mxu0 %v812
        %920 = vmatpush.msra.mxu0 %v800
        %921 = vmatpush.msra.mxu0 %v788
        %922 = vmatmul.f32.gmra.mxu0 %v884
        %v923 = vpop.f32.mrf.mxu0
        %v924 = vadd.f32 0.0, %v923
        %925 = vdwg.mxu0
        %926 = vmatpush.msra.mxu0 0.0
        %927 = vmatpush.msra.mxu0 0.0
        %928 = vmatpush.msra.mxu0 0.0
        %929 = vmatpush.msra.mxu0 0.0
        %930 = vmatpush.msra.mxu0 0.0
        %931 = vmatpush.msra.mxu0 0.0
        %932 = vmatpush.msra.mxu0 0.0
        %933 = vmatpush.msra.mxu0 0.0
        %934 = vmatpush.msra.mxu0 %v873
        %935 = vmatpush.msra.mxu0 %v861
        %936 = vmatpush.msra.mxu0 %v849
        %937 = vmatpush.msra.mxu0 %v837
        %938 = vmatpush.msra.mxu0 %v825
        %939 = vmatpush.msra.mxu0 %v813
        %940 = vmatpush.msra.mxu0 %v801
        %941 = vmatpush.msra.mxu0 %v789
        %942 = vmatmul.f32.gmra.mxu0 %v884
        %v943 = vpop.f32.mrf.mxu0
        %v944 = vadd.f32 0.0, %v943
        %945 = vdwg.mxu0
        %946 = vmatpush.msra.mxu0 0.0
        %947 = vmatpush.msra.mxu0 0.0
        %948 = vmatpush.msra.mxu0 0.0
        %949 = vmatpush.msra.mxu0 0.0
        %950 = vmatpush.msra.mxu0 0.0
        %951 = vmatpush.msra.mxu0 0.0
        %952 = vmatpush.msra.mxu0 0.0
        %953 = vmatpush.msra.mxu0 0.0
        %954 = vmatpush.msra.mxu0 %v874
        %955 = vmatpush.msra.mxu0 %v862
        %956 = vmatpush.msra.mxu0 %v850
        %957 = vmatpush.msra.mxu0 %v838
        %958 = vmatpush.msra.mxu0 %v826
        %959 = vmatpush.msra.mxu0 %v814
        %960 = vmatpush.msra.mxu0 %v802
        %961 = vmatpush.msra.mxu0 %v790
        %962 = vmatmul.f32.gmra.mxu0 %v884
        %v963 = vpop.f32.mrf.mxu0
        %v964 = vadd.f32 0.0, %v963
        %965 = vdwg.mxu0
        %966 = vmatpush.msra.mxu0 0.0
        %967 = vmatpush.msra.mxu0 0.0
        %968 = vmatpush.msra.mxu0 0.0
        %969 = vmatpush.msra.mxu0 0.0
        %970 = vmatpush.msra.mxu0 0.0
        %971 = vmatpush.msra.mxu0 0.0
        %972 = vmatpush.msra.mxu0 0.0
        %973 = vmatpush.msra.mxu0 0.0
        %974 = vmatpush.msra.mxu0 %v875
        %975 = vmatpush.msra.mxu0 %v863
        %976 = vmatpush.msra.mxu0 %v851
        %977 = vmatpush.msra.mxu0 %v839
        %978 = vmatpush.msra.mxu0 %v827
        %979 = vmatpush.msra.mxu0 %v815
        %980 = vmatpush.msra.mxu0 %v803
        %981 = vmatpush.msra.mxu0 %v791
        %982 = vmatmul.f32.gmra.mxu0 %v884
        %v983 = vpop.f32.mrf.mxu0
        %v984 = vadd.f32 0.0, %v983
        %985 = vdwg.mxu0
        %986 = vmatpush.msra.mxu0 0.0
        %987 = vmatpush.msra.mxu0 0.0
        %988 = vmatpush.msra.mxu0 0.0
        %989 = vmatpush.msra.mxu0 0.0
        %990 = vmatpush.msra.mxu0 0.0
        %991 = vmatpush.msra.mxu0 0.0
        %992 = vmatpush.msra.mxu0 0.0
        %993 = vmatpush.msra.mxu0 0.0
        %994 = vmatpush.msra.mxu0 %v876
        %995 = vmatpush.msra.mxu0 %v864
        %996 = vmatpush.msra.mxu0 %v852
        %997 = vmatpush.msra.mxu0 %v840
        %998 = vmatpush.msra.mxu0 %v828
        %999 = vmatpush.msra.mxu0 %v816
        %1000 = vmatpush.msra.mxu0 %v804
        %1001 = vmatpush.msra.mxu0 %v792
        %1002 = vmatmul.f32.gmra.mxu0 %v884
        %v1003 = vpop.f32.mrf.mxu0
        %v1004 = vadd.f32 0.0, %v1003
        %1005 = vdwg.mxu0
        %1006 = vmatpush.msra.mxu0 0.0
        %1007 = vmatpush.msra.mxu0 0.0
        %1008 = vmatpush.msra.mxu0 0.0
        %1009 = vmatpush.msra.mxu0 0.0
        %1010 = vmatpush.msra.mxu0 0.0
        %1011 = vmatpush.msra.mxu0 0.0
        %1012 = vmatpush.msra.mxu0 0.0
        %1013 = vmatpush.msra.mxu0 0.0
        %1014 = vmatpush.msra.mxu0 %v877
        %1015 = vmatpush.msra.mxu0 %v865
        %1016 = vmatpush.msra.mxu0 %v853
        %1017 = vmatpush.msra.mxu0 %v841
        %1018 = vmatpush.msra.mxu0 %v829
        %1019 = vmatpush.msra.mxu0 %v817
        %1020 = vmatpush.msra.mxu0 %v805
        %1021 = vmatpush.msra.mxu0 %v793
        %1022 = vmatmul.f32.gmra.mxu0 %v884
        %v1023 = vpop.f32.mrf.mxu0
        %v1024 = vadd.f32 0.0, %v1023
        %1025 = vdwg.mxu0
        %1026 = vmatpush.msra.mxu0 0.0
        %1027 = vmatpush.msra.mxu0 0.0
        %1028 = vmatpush.msra.mxu0 0.0
        %1029 = vmatpush.msra.mxu0 0.0
        %1030 = vmatpush.msra.mxu0 0.0
        %1031 = vmatpush.msra.mxu0 0.0
        %1032 = vmatpush.msra.mxu0 0.0
        %1033 = vmatpush.msra.mxu0 0.0
        %1034 = vmatpush.msra.mxu0 %v878
        %1035 = vmatpush.msra.mxu0 %v866
        %1036 = vmatpush.msra.mxu0 %v854
        %1037 = vmatpush.msra.mxu0 %v842
        %1038 = vmatpush.msra.mxu0 %v830
        %1039 = vmatpush.msra.mxu0 %v818
        %1040 = vmatpush.msra.mxu0 %v806
        %1041 = vmatpush.msra.mxu0 %v794
        %1042 = vmatmul.f32.gmra.mxu0 %v884
        %v1043 = vpop.f32.mrf.mxu0
        %v1044 = vadd.f32 0.0, %v1043
        %1045 = vdwg.mxu0
        %1046 = vmatpush.msra.mxu0 0.0
        %1047 = vmatpush.msra.mxu0 0.0
        %1048 = vmatpush.msra.mxu0 0.0
        %1049 = vmatpush.msra.mxu0 0.0
        %1050 = vmatpush.msra.mxu0 0.0
        %1051 = vmatpush.msra.mxu0 0.0
        %1052 = vmatpush.msra.mxu0 0.0
        %1053 = vmatpush.msra.mxu0 0.0
        %1054 = vmatpush.msra.mxu0 %v879
        %1055 = vmatpush.msra.mxu0 %v867
        %1056 = vmatpush.msra.mxu0 %v855
        %1057 = vmatpush.msra.mxu0 %v843
        %1058 = vmatpush.msra.mxu0 %v831
        %1059 = vmatpush.msra.mxu0 %v819
        %1060 = vmatpush.msra.mxu0 %v807
        %1061 = vmatpush.msra.mxu0 %v795
        %1062 = vmatmul.f32.gmra.mxu0 %v884
        %v1063 = vpop.f32.mrf.mxu0
        %v1064 = vadd.f32 0.0, %v1063
        %1065 = vdwg.mxu0
        %1066 = vmatpush.msra.mxu0 0.0
        %1067 = vmatpush.msra.mxu0 0.0
        %1068 = vmatpush.msra.mxu0 0.0
        %1069 = vmatpush.msra.mxu0 0.0
        %1070 = vmatpush.msra.mxu0 0.0
        %1071 = vmatpush.msra.mxu0 0.0
        %1072 = vmatpush.msra.mxu0 0.0
        %1073 = vmatpush.msra.mxu0 0.0
        %1074 = vmatpush.msra.mxu0 %v880
        %1075 = vmatpush.msra.mxu0 %v868
        %1076 = vmatpush.msra.mxu0 %v856
        %1077 = vmatpush.msra.mxu0 %v844
        %1078 = vmatpush.msra.mxu0 %v832
        %1079 = vmatpush.msra.mxu0 %v820
        %1080 = vmatpush.msra.mxu0 %v808
        %1081 = vmatpush.msra.mxu0 %v796
        %1082 = vmatmul.f32.gmra.mxu0 %v884
        %v1083 = vpop.f32.mrf.mxu0
        %v1084 = vadd.f32 0.0, %v1083
        %1085 = vdwg.mxu0
        %1086 = vmatpush.msra.mxu0 0.0
        %1087 = vmatpush.msra.mxu0 0.0
        %1088 = vmatpush.msra.mxu0 0.0
        %1089 = vmatpush.msra.mxu0 0.0
        %1090 = vmatpush.msra.mxu0 0.0
        %1091 = vmatpush.msra.mxu0 0.0
        %1092 = vmatpush.msra.mxu0 0.0
        %1093 = vmatpush.msra.mxu0 0.0
        %1094 = vmatpush.msra.mxu0 %v881
        %1095 = vmatpush.msra.mxu0 %v869
        %1096 = vmatpush.msra.mxu0 %v857
        %1097 = vmatpush.msra.mxu0 %v845
        %1098 = vmatpush.msra.mxu0 %v833
        %1099 = vmatpush.msra.mxu0 %v821
        %1100 = vmatpush.msra.mxu0 %v809
        %1101 = vmatpush.msra.mxu0 %v797
        %1102 = vmatmul.f32.gmra.mxu0 %v884
        %v1103 = vpop.f32.mrf.mxu0
        %v1104 = vadd.f32 0.0, %v1103
        %1105 = vdwg.mxu0
        %1106 = vmatpush.msra.mxu0 0.0
        %1107 = vmatpush.msra.mxu0 0.0
        %1108 = vmatpush.msra.mxu0 0.0
        %1109 = vmatpush.msra.mxu0 0.0
        %1110 = vmatpush.msra.mxu0 0.0
        %1111 = vmatpush.msra.mxu0 0.0
        %1112 = vmatpush.msra.mxu0 0.0
        %1113 = vmatpush.msra.mxu0 0.0
        %1114 = vmatpush.msra.mxu0 %v882
        %1115 = vmatpush.msra.mxu0 %v870
        %1116 = vmatpush.msra.mxu0 %v858
        %1117 = vmatpush.msra.mxu0 %v846
        %1118 = vmatpush.msra.mxu0 %v834
        %1119 = vmatpush.msra.mxu0 %v822
        %1120 = vmatpush.msra.mxu0 %v810
        %1121 = vmatpush.msra.mxu0 %v798
        %1122 = vmatmul.f32.gmra.mxu0 %v884
        %v1123 = vpop.f32.mrf.mxu0
        %v1124 = vadd.f32 0.0, %v1123
        %1125 = vdwg.mxu0
        %v1126 = vld [vmem:[%s7] sm:$0xff]
        %v1127 = vld [vmem:[%s7 + $0x8] sm:$0xff]
        %v1128 = vld [vmem:[%s7 + $0x10] sm:$0xff]
        %v1129 = vld [vmem:[%s7 + $0x18] sm:$0xff]
        %v1130 = vld [vmem:[%s7 + $0x20] sm:$0xff]
        %v1131 = vld [vmem:[%s7 + $0x28] sm:$0xff]
        %v1132 = vld [vmem:[%s7 + $0x30] sm:$0xff]
        %v1133 = vld [vmem:[%s7 + $0x38] sm:$0xff]
        %v1134 = vld [vmem:[%s7 + $0x40] sm:$0xff]
        %v1135 = vld [vmem:[%s7 + $0x48] sm:$0xff]
        %v1136 = vld [vmem:[%s7 + $0x50] sm:$0xff]
        %v1137 = vld [vmem:[%s7 + $0x58] sm:$0xff]
        %v1138 = vld [vmem:[%s7 + $0x60] sm:$0xff]
        %v1139 = vld [vmem:[%s7 + $0x68] sm:$0xff]
        %v1140 = vld [vmem:[%s7 + $0x70] sm:$0xff]
        %v1141 = vld [vmem:[%s7 + $0x78] sm:$0xff]
        %v1142 = vld [vmem:[%s7 + $0x80] sm:$0xff]
        %v1143 = vld [vmem:[%s7 + $0x88] sm:$0xff]
        %v1144 = vld [vmem:[%s7 + $0x90] sm:$0xff]
        %v1145 = vld [vmem:[%s7 + $0x98] sm:$0xff]
        %v1146 = vld [vmem:[%s7 + $0xa0] sm:$0xff]
        %v1147 = vld [vmem:[%s7 + $0xa8] sm:$0xff]
        %v1148 = vld [vmem:[%s7 + $0xb0] sm:$0xff]
        %v1149 = vld [vmem:[%s7 + $0xb8] sm:$0xff]
        %v1150 = vld [vmem:[%s7 + $0xc0] sm:$0xff]
        %v1151 = vld [vmem:[%s7 + $0xc8] sm:$0xff]
        %v1152 = vld [vmem:[%s7 + $0xd0] sm:$0xff]
        %v1153 = vld [vmem:[%s7 + $0xd8] sm:$0xff]
        %v1154 = vld [vmem:[%s7 + $0xe0] sm:$0xff]
        %v1155 = vld [vmem:[%s7 + $0xe8] sm:$0xff]
        %v1156 = vld [vmem:[%s7 + $0xf0] sm:$0xff]
        %v1157 = vld [vmem:[%s7 + $0xf8] sm:$0xff]
        %v1158 = vld [vmem:[%s7 + $0x100] sm:$0xff]
        %v1159 = vld [vmem:[%s7 + $0x108] sm:$0xff]
        %v1160 = vld [vmem:[%s7 + $0x110] sm:$0xff]
        %v1161 = vld [vmem:[%s7 + $0x118] sm:$0xff]
        %v1162 = vld [vmem:[%s7 + $0x120] sm:$0xff]
        %v1163 = vld [vmem:[%s7 + $0x128] sm:$0xff]
        %v1164 = vld [vmem:[%s7 + $0x130] sm:$0xff]
        %v1165 = vld [vmem:[%s7 + $0x138] sm:$0xff]
        %v1166 = vld [vmem:[%s7 + $0x140] sm:$0xff]
        %v1167 = vld [vmem:[%s7 + $0x148] sm:$0xff]
        %v1168 = vld [vmem:[%s7 + $0x150] sm:$0xff]
        %v1169 = vld [vmem:[%s7 + $0x158] sm:$0xff]
        %v1170 = vld [vmem:[%s7 + $0x160] sm:$0xff]
        %v1171 = vld [vmem:[%s7 + $0x168] sm:$0xff]
        %v1172 = vld [vmem:[%s7 + $0x170] sm:$0xff]
        %v1173 = vld [vmem:[%s7 + $0x178] sm:$0xff]
        %v1174 = vld [vmem:[%s7 + $0x180] sm:$0xff]
        %v1175 = vld [vmem:[%s7 + $0x188] sm:$0xff]
        %v1176 = vld [vmem:[%s7 + $0x190] sm:$0xff]
        %v1177 = vld [vmem:[%s7 + $0x198] sm:$0xff]
        %v1178 = vld [vmem:[%s7 + $0x1a0] sm:$0xff]
        %v1179 = vld [vmem:[%s7 + $0x1a8] sm:$0xff]
        %v1180 = vld [vmem:[%s7 + $0x1b0] sm:$0xff]
        %v1181 = vld [vmem:[%s7 + $0x1b8] sm:$0xff]
        %v1182 = vld [vmem:[%s7 + $0x1c0] sm:$0xff]
        %v1183 = vld [vmem:[%s7 + $0x1c8] sm:$0xff]
        %v1184 = vld [vmem:[%s7 + $0x1d0] sm:$0xff]
        %v1185 = vld [vmem:[%s7 + $0x1d8] sm:$0xff]
        %v1186 = vld [vmem:[%s7 + $0x1e0] sm:$0xff]
        %v1187 = vld [vmem:[%s7 + $0x1e8] sm:$0xff]
        %v1188 = vld [vmem:[%s7 + $0x1f0] sm:$0xff]
        %v1189 = vld [vmem:[%s7 + $0x1f8] sm:$0xff]
        %v1191 = vsel %vm629, %v904, 0
        %v1194 = vsel %vm629, %v984, 0
        %1196 = vmatpush.xpose.msra.mxu0 0.0
        %1197 = vmatpush.xpose.msra.mxu0 0.0
        %1198 = vmatpush.xpose.msra.mxu0 0.0
        %1199 = vmatpush.xpose.msra.mxu0 0.0
        %1200 = vmatpush.xpose.msra.mxu0 0.0
        %1201 = vmatpush.xpose.msra.mxu0 0.0
        %1202 = vmatpush.xpose.msra.mxu0 0.0
        %1203 = vmatpush.xpose.msra.mxu0 0.0
        %1204 = vmatpush.xpose.msra.mxu0 0.0
        %1205 = vmatpush.xpose.msra.mxu0 0.0
        %1206 = vmatpush.xpose.msra.mxu0 0.0
        %1207 = vmatpush.xpose.msra.mxu0 0.0
        %1208 = vmatpush.xpose.msra.mxu0 0.0
        %1209 = vmatpush.xpose.msra.mxu0 0.0
        %1210 = vmatpush.xpose.msra.mxu0 0.0
        %1211 = vmatpush.xpose.msra.mxu0 %v1194
        %1212 = vmatmul.f32.gmra.mxu0 %v1191
        %v1213 = vpop.f32.mrf.mxu0
        %v1214 = vadd.f32 0.0, %v1213
        %1215 = vdwg.mxu0
        %v1216 = vmul.f32 %v1214, 0.125
        %vm1217 = vcmask 27648
        %v1218 = vsel %vm1217, %v1216, -inf
        %1219 = vmax.xlane.f32.xlu0 %v1218
        %v1220 = vpop.xlane.xlu0 %1219
        %v1221 = vsub.f32 %v1216, %v1220
        %v1222 = vmul.f32 %v1221, 1.442695
        %v1223 = vpow.pop %v1222
        %v1224 = vsel %vm1217, %v1223, 0.0
        %1225 = vadd.xlane.f32.xlu0 %v1224
        %v1226 = vpop.xlane.xlu0 %1225
        %vm1227 = vcmask 31744
        %v1229 = vsel %vm1227, %v1223, 0
        %v1232 = vsel %vm673, %v1064, 0
        %1234 = vmatpush.msra.mxu0 0.0
        %1235 = vmatpush.msra.mxu0 0.0
        %1236 = vmatpush.msra.mxu0 0.0
        %1237 = vmatpush.msra.mxu0 0.0
        %1238 = vmatpush.msra.mxu0 0.0
        %1239 = vmatpush.msra.mxu0 0.0
        %1240 = vmatpush.msra.mxu0 0.0
        %1241 = vmatpush.msra.mxu0 0.0
        %1242 = vmatpush.msra.mxu0 0.0
        %1243 = vmatpush.msra.mxu0 0.0
        %1244 = vmatpush.msra.mxu0 0.0
        %1245 = vmatpush.msra.mxu0 0.0
        %1246 = vmatpush.msra.mxu0 0.0
        %1247 = vmatpush.msra.mxu0 0.0
        %1248 = vmatpush.msra.mxu0 0.0
        %1249 = vmatpush.msra.mxu0 %v1232
        %1250 = vmatmul.f32.gmra.mxu0 %v1229
        %v1251 = vpop.f32.mrf.mxu0
        %v1252 = vadd.f32 0.0, %v1251
        %1253 = vdwg.mxu0
        %v1254 = vrcp.pop %v1226
        %v1255 = vmul.f32 %v1226, %v1254
        %v1256 = vsub.f32 1.0, %v1255
        %v1257 = vmul.f32 %v1254, %v1256
        %v1258 = vadd.f32 %v1254, %v1257
        %vm1259 = vweird.f32 %v1226
        %vm1260 = vweird.f32 %v1254
        %vm1261 = vmor %vm1259, %vm1260
        %v1262 = vsel %vm1261, %v1254, %v1258
        %v1263 = vand.u32 2147483647, %v1226
        %vm1264 = vcmp.eq.f32.partialorder %v1263, 8.507059e+37
        %v1265 = vand.u32 %v1226, 2147483648
        %v1266 = vor.u32 1.1754944e-38, %v1265
        %v1267 = vsel %vm1264, %v1266, %v1262
        %v1268 = vmul.f32 %v1252, %v1267
        %1269 = vrot.lane.b32.xlu0 %v904, 64
        %v1270 = vpop.permute.xlu0 %1269
        %1271 = vrot.lane.b32.xlu0 %v984, 64
        %v1272 = vpop.permute.xlu0 %1271
        %v1273 = vsel %vm629, %v1270, 0
        %v1275 = vsel %vm629, %v1272, 0
        %1277 = vmatpush.xpose.msra.mxu0 0.0
        %1278 = vmatpush.xpose.msra.mxu0 0.0
        %1279 = vmatpush.xpose.msra.mxu0 0.0
        %1280 = vmatpush.xpose.msra.mxu0 0.0
        %1281 = vmatpush.xpose.msra.mxu0 0.0
        %1282 = vmatpush.xpose.msra.mxu0 0.0
        %1283 = vmatpush.xpose.msra.mxu0 0.0
        %1284 = vmatpush.xpose.msra.mxu0 0.0
        %1285 = vmatpush.xpose.msra.mxu0 0.0
        %1286 = vmatpush.xpose.msra.mxu0 0.0
        %1287 = vmatpush.xpose.msra.mxu0 0.0
        %1288 = vmatpush.xpose.msra.mxu0 0.0
        %1289 = vmatpush.xpose.msra.mxu0 0.0
        %1290 = vmatpush.xpose.msra.mxu0 0.0
        %1291 = vmatpush.xpose.msra.mxu0 0.0
        %1292 = vmatpush.xpose.msra.mxu0 %v1275
        %1293 = vmatmul.f32.gmra.mxu0 %v1273
        %v1294 = vpop.f32.mrf.mxu0
        %v1295 = vadd.f32 0.0, %v1294
        %1296 = vdwg.mxu0
        %v1297 = vmul.f32 %v1295, 0.125
        %v1298 = vsel %vm1217, %v1297, -inf
        %1299 = vmax.xlane.f32.xlu0 %v1298
        %v1300 = vpop.xlane.xlu0 %1299
        %v1301 = vsub.f32 %v1297, %v1300
        %v1302 = vmul.f32 %v1301, 1.442695
        %v1303 = vpow.pop %v1302
        %v1304 = vsel %vm1217, %v1303, 0.0
        %1305 = vadd.xlane.f32.xlu0 %v1304
        %v1306 = vpop.xlane.xlu0 %1305
        %1307 = vrot.lane.b32.xlu0 %v1064, 64
        %v1308 = vpop.permute.xlu0 %1307
        %v1310 = vsel %vm1227, %v1303, 0
        %v1312 = vsel %vm673, %v1308, 0
        %1314 = vmatpush.msra.mxu0 0.0
        %1315 = vmatpush.msra.mxu0 0.0
        %1316 = vmatpush.msra.mxu0 0.0
        %1317 = vmatpush.msra.mxu0 0.0
        %1318 = vmatpush.msra.mxu0 0.0
        %1319 = vmatpush.msra.mxu0 0.0
        %1320 = vmatpush.msra.mxu0 0.0
        %1321 = vmatpush.msra.mxu0 0.0
        %1322 = vmatpush.msra.mxu0 0.0
        %1323 = vmatpush.msra.mxu0 0.0
        %1324 = vmatpush.msra.mxu0 0.0
        %1325 = vmatpush.msra.mxu0 0.0
        %1326 = vmatpush.msra.mxu0 0.0
        %1327 = vmatpush.msra.mxu0 0.0
        %1328 = vmatpush.msra.mxu0 0.0
        %1329 = vmatpush.msra.mxu0 %v1312
        %1330 = vmatmul.f32.gmra.mxu0 %v1310
        %v1331 = vpop.f32.mrf.mxu0
        %v1332 = vadd.f32 0.0, %v1331
        %1333 = vdwg.mxu0
        %v1334 = vrcp.pop %v1306
        %v1335 = vmul.f32 %v1306, %v1334
        %v1336 = vsub.f32 1.0, %v1335
        %v1337 = vmul.f32 %v1334, %v1336
        %v1338 = vadd.f32 %v1334, %v1337
        %vm1339 = vweird.f32 %v1306
        %vm1340 = vweird.f32 %v1334
        %vm1341 = vmor %vm1339, %vm1340
        %v1342 = vsel %vm1341, %v1334, %v1338
        %v1343 = vand.u32 2147483647, %v1306
        %vm1344 = vcmp.eq.f32.partialorder %v1343, 8.507059e+37
        %v1345 = vand.u32 %v1306, 2147483648
        %v1346 = vor.u32 1.1754944e-38, %v1345
        %v1347 = vsel %vm1344, %v1346, %v1342
        %v1348 = vmul.f32 %v1332, %v1347
        %v1350 = vsel %vm629, %v1348, 0
        %1352 = vmatpush.msra.mxu0 0.0
        %1353 = vmatpush.msra.mxu0 0.0
        %1354 = vmatpush.msra.mxu0 0.0
        %1355 = vmatpush.msra.mxu0 0.0
        %1356 = vmatpush.msra.mxu0 0.0
        %1357 = vmatpush.msra.mxu0 0.0
        %1358 = vmatpush.msra.mxu0 0.0
        %1359 = vmatpush.msra.mxu0 0.0
        %1360 = vmatpush.msra.mxu0 %v1141
        %1361 = vmatpush.msra.mxu0 %v1140
        %1362 = vmatpush.msra.mxu0 %v1139
        %1363 = vmatpush.msra.mxu0 %v1138
        %1364 = vmatpush.msra.mxu0 %v1137
        %1365 = vmatpush.msra.mxu0 %v1136
        %1366 = vmatpush.msra.mxu0 %v1135
        %1367 = vmatpush.msra.mxu0 %v1134
        %1368 = vmatmul.f32.gmra.mxu0 %v1350
        %v1369 = vpop.f32.mrf.mxu0
        %v1370 = vadd.f32 0.0, %v1369
        %1371 = vdwg.mxu0
        %v1373 = vsel %vm629, %v1268, 0
        %1375 = vmatpush.msra.mxu0 0.0
        %1376 = vmatpush.msra.mxu0 0.0
        %1377 = vmatpush.msra.mxu0 0.0
        %1378 = vmatpush.msra.mxu0 0.0
        %1379 = vmatpush.msra.mxu0 0.0
        %1380 = vmatpush.msra.mxu0 0.0
        %1381 = vmatpush.msra.mxu0 0.0
        %1382 = vmatpush.msra.mxu0 0.0
        %1383 = vmatpush.msra.mxu0 %v1133
        %1384 = vmatpush.msra.mxu0 %v1132
        %1385 = vmatpush.msra.mxu0 %v1131
        %1386 = vmatpush.msra.mxu0 %v1130
        %1387 = vmatpush.msra.mxu0 %v1129
        %1388 = vmatpush.msra.mxu0 %v1128
        %1389 = vmatpush.msra.mxu0 %v1127
        %1390 = vmatpush.msra.mxu0 %v1126
        %1391 = vmatmul.f32.gmra.mxu0 %v1373
        %v1392 = vpop.f32.mrf.mxu0
        %v1393 = vadd.f32 %v1370, %v1392
        %1394 = vdwg.mxu0
        %v1396 = vsel %vm629, %v924, 0
        %v1399 = vsel %vm629, %v1004, 0
        %1401 = vmatpush.xpose.msra.mxu0 0.0
        %1402 = vmatpush.xpose.msra.mxu0 0.0
        %1403 = vmatpush.xpose.msra.mxu0 0.0
        %1404 = vmatpush.xpose.msra.mxu0 0.0
        %1405 = vmatpush.xpose.msra.mxu0 0.0
        %1406 = vmatpush.xpose.msra.mxu0 0.0
        %1407 = vmatpush.xpose.msra.mxu0 0.0
        %1408 = vmatpush.xpose.msra.mxu0 0.0
        %1409 = vmatpush.xpose.msra.mxu0 0.0
        %1410 = vmatpush.xpose.msra.mxu0 0.0
        %1411 = vmatpush.xpose.msra.mxu0 0.0
        %1412 = vmatpush.xpose.msra.mxu0 0.0
        %1413 = vmatpush.xpose.msra.mxu0 0.0
        %1414 = vmatpush.xpose.msra.mxu0 0.0
        %1415 = vmatpush.xpose.msra.mxu0 0.0
        %1416 = vmatpush.xpose.msra.mxu0 %v1399
        %1417 = vmatmul.f32.gmra.mxu0 %v1396
        %v1418 = vpop.f32.mrf.mxu0
        %v1419 = vadd.f32 0.0, %v1418
        %1420 = vdwg.mxu0
        %v1421 = vmul.f32 %v1419, 0.125
        %v1422 = vsel %vm1217, %v1421, -inf
        %1423 = vmax.xlane.f32.xlu0 %v1422
        %v1424 = vpop.xlane.xlu0 %1423
        %v1425 = vsub.f32 %v1421, %v1424
        %v1426 = vmul.f32 %v1425, 1.442695
        %v1427 = vpow.pop %v1426
        %v1428 = vsel %vm1217, %v1427, 0.0
        %1429 = vadd.xlane.f32.xlu0 %v1428
        %v1430 = vpop.xlane.xlu0 %1429
        %v1432 = vsel %vm1227, %v1427, 0
        %v1435 = vsel %vm673, %v1084, 0
        %1437 = vmatpush.msra.mxu0 0.0
        %1438 = vmatpush.msra.mxu0 0.0
        %1439 = vmatpush.msra.mxu0 0.0
        %1440 = vmatpush.msra.mxu0 0.0
        %1441 = vmatpush.msra.mxu0 0.0
        %1442 = vmatpush.msra.mxu0 0.0
        %1443 = vmatpush.msra.mxu0 0.0
        %1444 = vmatpush.msra.mxu0 0.0
        %1445 = vmatpush.msra.mxu0 0.0
        %1446 = vmatpush.msra.mxu0 0.0
        %1447 = vmatpush.msra.mxu0 0.0
        %1448 = vmatpush.msra.mxu0 0.0
        %1449 = vmatpush.msra.mxu0 0.0
        %1450 = vmatpush.msra.mxu0 0.0
        %1451 = vmatpush.msra.mxu0 0.0
        %1452 = vmatpush.msra.mxu0 %v1435
        %1453 = vmatmul.f32.gmra.mxu0 %v1432
        %v1454 = vpop.f32.mrf.mxu0
        %v1455 = vadd.f32 0.0, %v1454
        %1456 = vdwg.mxu0
        %v1457 = vrcp.pop %v1430
        %v1458 = vmul.f32 %v1430, %v1457
        %v1459 = vsub.f32 1.0, %v1458
        %v1460 = vmul.f32 %v1457, %v1459
        %v1461 = vadd.f32 %v1457, %v1460
        %vm1462 = vweird.f32 %v1430
        %vm1463 = vweird.f32 %v1457
        %vm1464 = vmor %vm1462, %vm1463
        %v1465 = vsel %vm1464, %v1457, %v1461
        %v1466 = vand.u32 2147483647, %v1430
        %vm1467 = vcmp.eq.f32.partialorder %v1466, 8.507059e+37
        %v1468 = vand.u32 %v1430, 2147483648
        %v1469 = vor.u32 1.1754944e-38, %v1468
        %v1470 = vsel %vm1467, %v1469, %v1465
        %v1471 = vmul.f32 %v1455, %v1470
        %v1473 = vsel %vm629, %v1471, 0
        %1475 = vmatpush.msra.mxu0 0.0
        %1476 = vmatpush.msra.mxu0 0.0
        %1477 = vmatpush.msra.mxu0 0.0
        %1478 = vmatpush.msra.mxu0 0.0
        %1479 = vmatpush.msra.mxu0 0.0
        %1480 = vmatpush.msra.mxu0 0.0
        %1481 = vmatpush.msra.mxu0 0.0
        %1482 = vmatpush.msra.mxu0 0.0
        %1483 = vmatpush.msra.mxu0 %v1149
        %1484 = vmatpush.msra.mxu0 %v1148
        %1485 = vmatpush.msra.mxu0 %v1147
        %1486 = vmatpush.msra.mxu0 %v1146
        %1487 = vmatpush.msra.mxu0 %v1145
        %1488 = vmatpush.msra.mxu0 %v1144
        %1489 = vmatpush.msra.mxu0 %v1143
        %1490 = vmatpush.msra.mxu0 %v1142
        %1491 = vmatmul.f32.gmra.mxu0 %v1473
        %v1492 = vpop.f32.mrf.mxu0
        %v1493 = vadd.f32 0.0, %v1492
        %1494 = vdwg.mxu0
        %v1495 = vadd.f32 %v1393, %v1493
        %1496 = vrot.lane.b32.xlu0 %v924, 64
        %v1497 = vpop.permute.xlu0 %1496
        %1498 = vrot.lane.b32.xlu0 %v1004, 64
        %v1499 = vpop.permute.xlu0 %1498
        %v1500 = vsel %vm629, %v1497, 0
        %v1502 = vsel %vm629, %v1499, 0
        %1504 = vmatpush.xpose.msra.mxu0 0.0
        %1505 = vmatpush.xpose.msra.mxu0 0.0
        %1506 = vmatpush.xpose.msra.mxu0 0.0
        %1507 = vmatpush.xpose.msra.mxu0 0.0
        %1508 = vmatpush.xpose.msra.mxu0 0.0
        %1509 = vmatpush.xpose.msra.mxu0 0.0
        %1510 = vmatpush.xpose.msra.mxu0 0.0
        %1511 = vmatpush.xpose.msra.mxu0 0.0
        %1512 = vmatpush.xpose.msra.mxu0 0.0
        %1513 = vmatpush.xpose.msra.mxu0 0.0
        %1514 = vmatpush.xpose.msra.mxu0 0.0
        %1515 = vmatpush.xpose.msra.mxu0 0.0
        %1516 = vmatpush.xpose.msra.mxu0 0.0
        %1517 = vmatpush.xpose.msra.mxu0 0.0
        %1518 = vmatpush.xpose.msra.mxu0 0.0
        %1519 = vmatpush.xpose.msra.mxu0 %v1502
        %1520 = vmatmul.f32.gmra.mxu0 %v1500
        %v1521 = vpop.f32.mrf.mxu0
        %v1522 = vadd.f32 0.0, %v1521
        %1523 = vdwg.mxu0
        %v1524 = vmul.f32 %v1522, 0.125
        %v1525 = vsel %vm1217, %v1524, -inf
        %1526 = vmax.xlane.f32.xlu0 %v1525
        %v1527 = vpop.xlane.xlu0 %1526
        %v1528 = vsub.f32 %v1524, %v1527
        %v1529 = vmul.f32 %v1528, 1.442695
        %v1530 = vpow.pop %v1529
        %v1531 = vsel %vm1217, %v1530, 0.0
        %1532 = vadd.xlane.f32.xlu0 %v1531
        %v1533 = vpop.xlane.xlu0 %1532
        %1534 = vrot.lane.b32.xlu0 %v1084, 64
        %v1535 = vpop.permute.xlu0 %1534
        %v1537 = vsel %vm1227, %v1530, 0
        %v1539 = vsel %vm673, %v1535, 0
        %1541 = vmatpush.msra.mxu0 0.0
        %1542 = vmatpush.msra.mxu0 0.0
        %1543 = vmatpush.msra.mxu0 0.0
        %1544 = vmatpush.msra.mxu0 0.0
        %1545 = vmatpush.msra.mxu0 0.0
        %1546 = vmatpush.msra.mxu0 0.0
        %1547 = vmatpush.msra.mxu0 0.0
        %1548 = vmatpush.msra.mxu0 0.0
        %1549 = vmatpush.msra.mxu0 0.0
        %1550 = vmatpush.msra.mxu0 0.0
        %1551 = vmatpush.msra.mxu0 0.0
        %1552 = vmatpush.msra.mxu0 0.0
        %1553 = vmatpush.msra.mxu0 0.0
        %1554 = vmatpush.msra.mxu0 0.0
        %1555 = vmatpush.msra.mxu0 0.0
        %1556 = vmatpush.msra.mxu0 %v1539
        %1557 = vmatmul.f32.gmra.mxu0 %v1537
        %v1558 = vpop.f32.mrf.mxu0
        %v1559 = vadd.f32 0.0, %v1558
        %1560 = vdwg.mxu0
        %v1561 = vrcp.pop %v1533
        %v1562 = vmul.f32 %v1533, %v1561
        %v1563 = vsub.f32 1.0, %v1562
        %v1564 = vmul.f32 %v1561, %v1563
        %v1565 = vadd.f32 %v1561, %v1564
        %vm1566 = vweird.f32 %v1533
        %vm1567 = vweird.f32 %v1561
        %vm1568 = vmor %vm1566, %vm1567
        %v1569 = vsel %vm1568, %v1561, %v1565
        %v1570 = vand.u32 2147483647, %v1533
        %vm1571 = vcmp.eq.f32.partialorder %v1570, 8.507059e+37
        %v1572 = vand.u32 %v1533, 2147483648
        %v1573 = vor.u32 1.1754944e-38, %v1572
        %v1574 = vsel %vm1571, %v1573, %v1569
        %v1575 = vmul.f32 %v1559, %v1574
        %v1577 = vsel %vm629, %v1575, 0
        %1579 = vmatpush.msra.mxu0 0.0
        %1580 = vmatpush.msra.mxu0 0.0
        %1581 = vmatpush.msra.mxu0 0.0
        %1582 = vmatpush.msra.mxu0 0.0
        %1583 = vmatpush.msra.mxu0 0.0
        %1584 = vmatpush.msra.mxu0 0.0
        %1585 = vmatpush.msra.mxu0 0.0
        %1586 = vmatpush.msra.mxu0 0.0
        %1587 = vmatpush.msra.mxu0 %v1157
        %1588 = vmatpush.msra.mxu0 %v1156
        %1589 = vmatpush.msra.mxu0 %v1155
        %1590 = vmatpush.msra.mxu0 %v1154
        %1591 = vmatpush.msra.mxu0 %v1153
        %1592 = vmatpush.msra.mxu0 %v1152
        %1593 = vmatpush.msra.mxu0 %v1151
        %1594 = vmatpush.msra.mxu0 %v1150
        %1595 = vmatmul.f32.gmra.mxu0 %v1577
        %v1596 = vpop.f32.mrf.mxu0
        %v1597 = vadd.f32 0.0, %v1596
        %1598 = vdwg.mxu0
        %v1599 = vadd.f32 %v1495, %v1597
        %v1601 = vsel %vm629, %v944, 0
        %v1604 = vsel %vm629, %v1024, 0
        %1606 = vmatpush.xpose.msra.mxu0 0.0
        %1607 = vmatpush.xpose.msra.mxu0 0.0
        %1608 = vmatpush.xpose.msra.mxu0 0.0
        %1609 = vmatpush.xpose.msra.mxu0 0.0
        %1610 = vmatpush.xpose.msra.mxu0 0.0
        %1611 = vmatpush.xpose.msra.mxu0 0.0
        %1612 = vmatpush.xpose.msra.mxu0 0.0
        %1613 = vmatpush.xpose.msra.mxu0 0.0
        %1614 = vmatpush.xpose.msra.mxu0 0.0
        %1615 = vmatpush.xpose.msra.mxu0 0.0
        %1616 = vmatpush.xpose.msra.mxu0 0.0
        %1617 = vmatpush.xpose.msra.mxu0 0.0
        %1618 = vmatpush.xpose.msra.mxu0 0.0
        %1619 = vmatpush.xpose.msra.mxu0 0.0
        %1620 = vmatpush.xpose.msra.mxu0 0.0
        %1621 = vmatpush.xpose.msra.mxu0 %v1604
        %1622 = vmatmul.f32.gmra.mxu0 %v1601
        %v1623 = vpop.f32.mrf.mxu0
        %v1624 = vadd.f32 0.0, %v1623
        %1625 = vdwg.mxu0
        %v1626 = vmul.f32 %v1624, 0.125
        %v1627 = vsel %vm1217, %v1626, -inf
        %1628 = vmax.xlane.f32.xlu0 %v1627
        %v1629 = vpop.xlane.xlu0 %1628
        %v1630 = vsub.f32 %v1626, %v1629
        %v1631 = vmul.f32 %v1630, 1.442695
        %v1632 = vpow.pop %v1631
        %v1633 = vsel %vm1217, %v1632, 0.0
        %1634 = vadd.xlane.f32.xlu0 %v1633
        %v1635 = vpop.xlane.xlu0 %1634
        %v1637 = vsel %vm1227, %v1632, 0
        %v1640 = vsel %vm673, %v1104, 0
        %1642 = vmatpush.msra.mxu0 0.0
        %1643 = vmatpush.msra.mxu0 0.0
        %1644 = vmatpush.msra.mxu0 0.0
        %1645 = vmatpush.msra.mxu0 0.0
        %1646 = vmatpush.msra.mxu0 0.0
        %1647 = vmatpush.msra.mxu0 0.0
        %1648 = vmatpush.msra.mxu0 0.0
        %1649 = vmatpush.msra.mxu0 0.0
        %1650 = vmatpush.msra.mxu0 0.0
        %1651 = vmatpush.msra.mxu0 0.0
        %1652 = vmatpush.msra.mxu0 0.0
        %1653 = vmatpush.msra.mxu0 0.0
        %1654 = vmatpush.msra.mxu0 0.0
        %1655 = vmatpush.msra.mxu0 0.0
        %1656 = vmatpush.msra.mxu0 0.0
        %1657 = vmatpush.msra.mxu0 %v1640
        %1658 = vmatmul.f32.gmra.mxu0 %v1637
        %v1659 = vpop.f32.mrf.mxu0
        %v1660 = vadd.f32 0.0, %v1659
        %1661 = vdwg.mxu0
        %v1662 = vrcp.pop %v1635
        %v1663 = vmul.f32 %v1635, %v1662
        %v1664 = vsub.f32 1.0, %v1663
        %v1665 = vmul.f32 %v1662, %v1664
        %v1666 = vadd.f32 %v1662, %v1665
        %vm1667 = vweird.f32 %v1635
        %vm1668 = vweird.f32 %v1662
        %vm1669 = vmor %vm1667, %vm1668
        %v1670 = vsel %vm1669, %v1662, %v1666
        %v1671 = vand.u32 2147483647, %v1635
        %vm1672 = vcmp.eq.f32.partialorder %v1671, 8.507059e+37
        %v1673 = vand.u32 %v1635, 2147483648
        %v1674 = vor.u32 1.1754944e-38, %v1673
        %v1675 = vsel %vm1672, %v1674, %v1670
        %v1676 = vmul.f32 %v1660, %v1675
        %v1678 = vsel %vm629, %v1676, 0
        %1680 = vmatpush.msra.mxu0 0.0
        %1681 = vmatpush.msra.mxu0 0.0
        %1682 = vmatpush.msra.mxu0 0.0
        %1683 = vmatpush.msra.mxu0 0.0
        %1684 = vmatpush.msra.mxu0 0.0
        %1685 = vmatpush.msra.mxu0 0.0
        %1686 = vmatpush.msra.mxu0 0.0
        %1687 = vmatpush.msra.mxu0 0.0
        %1688 = vmatpush.msra.mxu0 %v1165
        %1689 = vmatpush.msra.mxu0 %v1164
        %1690 = vmatpush.msra.mxu0 %v1163
        %1691 = vmatpush.msra.mxu0 %v1162
        %1692 = vmatpush.msra.mxu0 %v1161
        %1693 = vmatpush.msra.mxu0 %v1160
        %1694 = vmatpush.msra.mxu0 %v1159
        %1695 = vmatpush.msra.mxu0 %v1158
        %1696 = vmatmul.f32.gmra.mxu0 %v1678
        %v1697 = vpop.f32.mrf.mxu0
        %v1698 = vadd.f32 0.0, %v1697
        %1699 = vdwg.mxu0
        %v1700 = vadd.f32 %v1599, %v1698
        %1701 = vrot.lane.b32.xlu0 %v944, 64
        %v1702 = vpop.permute.xlu0 %1701
        %1703 = vrot.lane.b32.xlu0 %v1024, 64
        %v1704 = vpop.permute.xlu0 %1703
        %v1705 = vsel %vm629, %v1702, 0
        %v1707 = vsel %vm629, %v1704, 0
        %1709 = vmatpush.xpose.msra.mxu0 0.0
        %1710 = vmatpush.xpose.msra.mxu0 0.0
        %1711 = vmatpush.xpose.msra.mxu0 0.0
        %1712 = vmatpush.xpose.msra.mxu0 0.0
        %1713 = vmatpush.xpose.msra.mxu0 0.0
        %1714 = vmatpush.xpose.msra.mxu0 0.0
        %1715 = vmatpush.xpose.msra.mxu0 0.0
        %1716 = vmatpush.xpose.msra.mxu0 0.0
        %1717 = vmatpush.xpose.msra.mxu0 0.0
        %1718 = vmatpush.xpose.msra.mxu0 0.0
        %1719 = vmatpush.xpose.msra.mxu0 0.0
        %1720 = vmatpush.xpose.msra.mxu0 0.0
        %1721 = vmatpush.xpose.msra.mxu0 0.0
        %1722 = vmatpush.xpose.msra.mxu0 0.0
        %1723 = vmatpush.xpose.msra.mxu0 0.0
        %1724 = vmatpush.xpose.msra.mxu0 %v1707
        %1725 = vmatmul.f32.gmra.mxu0 %v1705
        %v1726 = vpop.f32.mrf.mxu0
        %v1727 = vadd.f32 0.0, %v1726
        %1728 = vdwg.mxu0
        %v1729 = vmul.f32 %v1727, 0.125
        %v1730 = vsel %vm1217, %v1729, -inf
        %1731 = vmax.xlane.f32.xlu0 %v1730
        %v1732 = vpop.xlane.xlu0 %1731
        %v1733 = vsub.f32 %v1729, %v1732
        %v1734 = vmul.f32 %v1733, 1.442695
        %v1735 = vpow.pop %v1734
        %v1736 = vsel %vm1217, %v1735, 0.0
        %1737 = vadd.xlane.f32.xlu0 %v1736
        %v1738 = vpop.xlane.xlu0 %1737
        %1739 = vrot.lane.b32.xlu0 %v1104, 64
        %v1740 = vpop.permute.xlu0 %1739
        %v1742 = vsel %vm1227, %v1735, 0
        %v1744 = vsel %vm673, %v1740, 0
        %1746 = vmatpush.msra.mxu0 0.0
        %1747 = vmatpush.msra.mxu0 0.0
        %1748 = vmatpush.msra.mxu0 0.0
        %1749 = vmatpush.msra.mxu0 0.0
        %1750 = vmatpush.msra.mxu0 0.0
        %1751 = vmatpush.msra.mxu0 0.0
        %1752 = vmatpush.msra.mxu0 0.0
        %1753 = vmatpush.msra.mxu0 0.0
        %1754 = vmatpush.msra.mxu0 0.0
        %1755 = vmatpush.msra.mxu0 0.0
        %1756 = vmatpush.msra.mxu0 0.0
        %1757 = vmatpush.msra.mxu0 0.0
        %1758 = vmatpush.msra.mxu0 0.0
        %1759 = vmatpush.msra.mxu0 0.0
        %1760 = vmatpush.msra.mxu0 0.0
        %1761 = vmatpush.msra.mxu0 %v1744
        %1762 = vmatmul.f32.gmra.mxu0 %v1742
        %v1763 = vpop.f32.mrf.mxu0
        %v1764 = vadd.f32 0.0, %v1763
        %1765 = vdwg.mxu0
        %v1766 = vrcp.pop %v1738
        %v1767 = vmul.f32 %v1738, %v1766
        %v1768 = vsub.f32 1.0, %v1767
        %v1769 = vmul.f32 %v1766, %v1768
        %v1770 = vadd.f32 %v1766, %v1769
        %vm1771 = vweird.f32 %v1738
        %vm1772 = vweird.f32 %v1766
        %vm1773 = vmor %vm1771, %vm1772
        %v1774 = vsel %vm1773, %v1766, %v1770
        %v1775 = vand.u32 2147483647, %v1738
        %vm1776 = vcmp.eq.f32.partialorder %v1775, 8.507059e+37
        %v1777 = vand.u32 %v1738, 2147483648
        %v1778 = vor.u32 1.1754944e-38, %v1777
        %v1779 = vsel %vm1776, %v1778, %v1774
        %v1780 = vmul.f32 %v1764, %v1779
        %v1782 = vsel %vm629, %v1780, 0
        %1784 = vmatpush.msra.mxu0 0.0
        %1785 = vmatpush.msra.mxu0 0.0
        %1786 = vmatpush.msra.mxu0 0.0
        %1787 = vmatpush.msra.mxu0 0.0
        %1788 = vmatpush.msra.mxu0 0.0
        %1789 = vmatpush.msra.mxu0 0.0
        %1790 = vmatpush.msra.mxu0 0.0
        %1791 = vmatpush.msra.mxu0 0.0
        %1792 = vmatpush.msra.mxu0 %v1173
        %1793 = vmatpush.msra.mxu0 %v1172
        %1794 = vmatpush.msra.mxu0 %v1171
        %1795 = vmatpush.msra.mxu0 %v1170
        %1796 = vmatpush.msra.mxu0 %v1169
        %1797 = vmatpush.msra.mxu0 %v1168
        %1798 = vmatpush.msra.mxu0 %v1167
        %1799 = vmatpush.msra.mxu0 %v1166
        %1800 = vmatmul.f32.gmra.mxu0 %v1782
        %v1801 = vpop.f32.mrf.mxu0
        %v1802 = vadd.f32 0.0, %v1801
        %1803 = vdwg.mxu0
        %v1804 = vadd.f32 %v1700, %v1802
        %v1806 = vsel %vm629, %v964, 0
        %v1809 = vsel %vm629, %v1044, 0
        %1811 = vmatpush.xpose.msra.mxu0 0.0
        %1812 = vmatpush.xpose.msra.mxu0 0.0
        %1813 = vmatpush.xpose.msra.mxu0 0.0
        %1814 = vmatpush.xpose.msra.mxu0 0.0
        %1815 = vmatpush.xpose.msra.mxu0 0.0
        %1816 = vmatpush.xpose.msra.mxu0 0.0
        %1817 = vmatpush.xpose.msra.mxu0 0.0
        %1818 = vmatpush.xpose.msra.mxu0 0.0
        %1819 = vmatpush.xpose.msra.mxu0 0.0
        %1820 = vmatpush.xpose.msra.mxu0 0.0
        %1821 = vmatpush.xpose.msra.mxu0 0.0
        %1822 = vmatpush.xpose.msra.mxu0 0.0
        %1823 = vmatpush.xpose.msra.mxu0 0.0
        %1824 = vmatpush.xpose.msra.mxu0 0.0
        %1825 = vmatpush.xpose.msra.mxu0 0.0
        %1826 = vmatpush.xpose.msra.mxu0 %v1809
        %1827 = vmatmul.f32.gmra.mxu0 %v1806
        %v1828 = vpop.f32.mrf.mxu0
        %v1829 = vadd.f32 0.0, %v1828
        %1830 = vdwg.mxu0
        %v1831 = vmul.f32 %v1829, 0.125
        %v1832 = vsel %vm1217, %v1831, -inf
        %1833 = vmax.xlane.f32.xlu0 %v1832
        %v1834 = vpop.xlane.xlu0 %1833
        %v1835 = vsub.f32 %v1831, %v1834
        %v1836 = vmul.f32 %v1835, 1.442695
        %v1837 = vpow.pop %v1836
        %v1838 = vsel %vm1217, %v1837, 0.0
        %1839 = vadd.xlane.f32.xlu0 %v1838
        %v1840 = vpop.xlane.xlu0 %1839
        %v1842 = vsel %vm1227, %v1837, 0
        %v1845 = vsel %vm673, %v1124, 0
        %1847 = vmatpush.msra.mxu0 0.0
        %1848 = vmatpush.msra.mxu0 0.0
        %1849 = vmatpush.msra.mxu0 0.0
        %1850 = vmatpush.msra.mxu0 0.0
        %1851 = vmatpush.msra.mxu0 0.0
        %1852 = vmatpush.msra.mxu0 0.0
        %1853 = vmatpush.msra.mxu0 0.0
        %1854 = vmatpush.msra.mxu0 0.0
        %1855 = vmatpush.msra.mxu0 0.0
        %1856 = vmatpush.msra.mxu0 0.0
        %1857 = vmatpush.msra.mxu0 0.0
        %1858 = vmatpush.msra.mxu0 0.0
        %1859 = vmatpush.msra.mxu0 0.0
        %1860 = vmatpush.msra.mxu0 0.0
        %1861 = vmatpush.msra.mxu0 0.0
        %1862 = vmatpush.msra.mxu0 %v1845
        %1863 = vmatmul.f32.gmra.mxu0 %v1842
        %v1864 = vpop.f32.mrf.mxu0
        %v1865 = vadd.f32 0.0, %v1864
        %1866 = vdwg.mxu0
        %v1867 = vrcp.pop %v1840
        %v1868 = vmul.f32 %v1840, %v1867
        %v1869 = vsub.f32 1.0, %v1868
        %v1870 = vmul.f32 %v1867, %v1869
        %v1871 = vadd.f32 %v1867, %v1870
        %vm1872 = vweird.f32 %v1840
        %vm1873 = vweird.f32 %v1867
        %vm1874 = vmor %vm1872, %vm1873
        %v1875 = vsel %vm1874, %v1867, %v1871
        %v1876 = vand.u32 2147483647, %v1840
        %vm1877 = vcmp.eq.f32.partialorder %v1876, 8.507059e+37
        %v1878 = vand.u32 %v1840, 2147483648
        %v1879 = vor.u32 1.1754944e-38, %v1878
        %v1880 = vsel %vm1877, %v1879, %v1875
        %v1881 = vmul.f32 %v1865, %v1880
        %v1883 = vsel %vm629, %v1881, 0
        %1885 = vmatpush.msra.mxu0 0.0
        %1886 = vmatpush.msra.mxu0 0.0
        %1887 = vmatpush.msra.mxu0 0.0
        %1888 = vmatpush.msra.mxu0 0.0
        %1889 = vmatpush.msra.mxu0 0.0
        %1890 = vmatpush.msra.mxu0 0.0
        %1891 = vmatpush.msra.mxu0 0.0
        %1892 = vmatpush.msra.mxu0 0.0
        %1893 = vmatpush.msra.mxu0 %v1181
        %1894 = vmatpush.msra.mxu0 %v1180
        %1895 = vmatpush.msra.mxu0 %v1179
        %1896 = vmatpush.msra.mxu0 %v1178
        %1897 = vmatpush.msra.mxu0 %v1177
        %1898 = vmatpush.msra.mxu0 %v1176
        %1899 = vmatpush.msra.mxu0 %v1175
        %1900 = vmatpush.msra.mxu0 %v1174
        %1901 = vmatmul.f32.gmra.mxu0 %v1883
        %v1902 = vpop.f32.mrf.mxu0
        %v1903 = vadd.f32 0.0, %v1902
        %1904 = vdwg.mxu0
        %v1905 = vadd.f32 %v1804, %v1903
        %1906 = vrot.lane.b32.xlu0 %v964, 64
        %v1907 = vpop.permute.xlu0 %1906
        %1908 = vrot.lane.b32.xlu0 %v1044, 64
        %v1909 = vpop.permute.xlu0 %1908
        %v1910 = vsel %vm629, %v1907, 0
        %v1912 = vsel %vm629, %v1909, 0
        %1914 = vmatpush.xpose.msra.mxu0 0.0
        %1915 = vmatpush.xpose.msra.mxu0 0.0
        %1916 = vmatpush.xpose.msra.mxu0 0.0
        %1917 = vmatpush.xpose.msra.mxu0 0.0
        %1918 = vmatpush.xpose.msra.mxu0 0.0
        %1919 = vmatpush.xpose.msra.mxu0 0.0
        %1920 = vmatpush.xpose.msra.mxu0 0.0
        %1921 = vmatpush.xpose.msra.mxu0 0.0
        %1922 = vmatpush.xpose.msra.mxu0 0.0
        %1923 = vmatpush.xpose.msra.mxu0 0.0
        %1924 = vmatpush.xpose.msra.mxu0 0.0
        %1925 = vmatpush.xpose.msra.mxu0 0.0
        %1926 = vmatpush.xpose.msra.mxu0 0.0
        %1927 = vmatpush.xpose.msra.mxu0 0.0
        %1928 = vmatpush.xpose.msra.mxu0 0.0
        %1929 = vmatpush.xpose.msra.mxu0 %v1912
        %1930 = vmatmul.f32.gmra.mxu0 %v1910
        %v1931 = vpop.f32.mrf.mxu0
        %v1932 = vadd.f32 0.0, %v1931
        %1933 = vdwg.mxu0
        %v1934 = vmul.f32 %v1932, 0.125
        %v1935 = vsel %vm1217, %v1934, -inf
        %1936 = vmax.xlane.f32.xlu0 %v1935
        %v1937 = vpop.xlane.xlu0 %1936
        %v1938 = vsub.f32 %v1934, %v1937
        %v1939 = vmul.f32 %v1938, 1.442695
        %v1940 = vpow.pop %v1939
        %v1941 = vsel %vm1217, %v1940, 0.0
        %1942 = vadd.xlane.f32.xlu0 %v1941
        %v1943 = vpop.xlane.xlu0 %1942
        %1944 = vrot.lane.b32.xlu0 %v1124, 64
        %v1945 = vpop.permute.xlu0 %1944
        %v1947 = vsel %vm1227, %v1940, 0
        %v1949 = vsel %vm673, %v1945, 0
        %1951 = vmatpush.msra.mxu0 0.0
        %1952 = vmatpush.msra.mxu0 0.0
        %1953 = vmatpush.msra.mxu0 0.0
        %1954 = vmatpush.msra.mxu0 0.0
        %1955 = vmatpush.msra.mxu0 0.0
        %1956 = vmatpush.msra.mxu0 0.0
        %1957 = vmatpush.msra.mxu0 0.0
        %1958 = vmatpush.msra.mxu0 0.0
        %1959 = vmatpush.msra.mxu0 0.0
        %1960 = vmatpush.msra.mxu0 0.0
        %1961 = vmatpush.msra.mxu0 0.0
        %1962 = vmatpush.msra.mxu0 0.0
        %1963 = vmatpush.msra.mxu0 0.0
        %1964 = vmatpush.msra.mxu0 0.0
        %1965 = vmatpush.msra.mxu0 0.0
        %1966 = vmatpush.msra.mxu0 %v1949
        %1967 = vmatmul.f32.gmra.mxu0 %v1947
        %v1968 = vpop.f32.mrf.mxu0
        %v1969 = vadd.f32 0.0, %v1968
        %1970 = vdwg.mxu0
        %v1971 = vrcp.pop %v1943
        %v1972 = vmul.f32 %v1943, %v1971
        %v1973 = vsub.f32 1.0, %v1972
        %v1974 = vmul.f32 %v1971, %v1973
        %v1975 = vadd.f32 %v1971, %v1974
        %vm1976 = vweird.f32 %v1943
        %vm1977 = vweird.f32 %v1971
        %vm1978 = vmor %vm1976, %vm1977
        %v1979 = vsel %vm1978, %v1971, %v1975
        %v1980 = vand.u32 2147483647, %v1943
        %vm1981 = vcmp.eq.f32.partialorder %v1980, 8.507059e+37
        %v1982 = vand.u32 %v1943, 2147483648
        %v1983 = vor.u32 1.1754944e-38, %v1982
        %v1984 = vsel %vm1981, %v1983, %v1979
        %v1985 = vmul.f32 %v1969, %v1984
        %v1987 = vsel %vm629, %v1985, 0
        %1989 = vmatpush.msra.mxu0 0.0
        %1990 = vmatpush.msra.mxu0 0.0
        %1991 = vmatpush.msra.mxu0 0.0
        %1992 = vmatpush.msra.mxu0 0.0
        %1993 = vmatpush.msra.mxu0 0.0
        %1994 = vmatpush.msra.mxu0 0.0
        %1995 = vmatpush.msra.mxu0 0.0
        %1996 = vmatpush.msra.mxu0 0.0
        %1997 = vmatpush.msra.mxu0 %v1189
        %1998 = vmatpush.msra.mxu0 %v1188
        %1999 = vmatpush.msra.mxu0 %v1187
        %2000 = vmatpush.msra.mxu0 %v1186
        %2001 = vmatpush.msra.mxu0 %v1185
        %2002 = vmatpush.msra.mxu0 %v1184
        %2003 = vmatpush.msra.mxu0 %v1183
        %2004 = vmatpush.msra.mxu0 %v1182
        %2005 = vmatmul.f32.gmra.mxu0 %v1987
        %v2006 = vpop.f32.mrf.mxu0
        %v2007 = vadd.f32 0.0, %v2006
        %2008 = vdwg.mxu0
        %v2009 = vadd.f32 %v1905, %v2007
        %v2010 = vadd.f32 %v746, %v2009
        %v2011 = vld [vmem:[#allocation7] sm:$0x1]
        %v2013 = vperm.slane %v2011, 0
        %v2015 = vadd.f32 %v2010, %v2013
        %v2016 = vld [vmem:[#allocation8] sm:$0x1]
        %v2017 = vld [vmem:[#allocation10] sm:$0x1]
        %v2018 = vsel %vm749, %v2015, 0.0
        %2019 = vadd.xlane.f32.xlu0 %v2018
        %v2020 = vpop.xlane.xlu0 %2019
        %v2021 = vmul.f32 %v2020, %v759
        %v2022 = vsub.f32 %v2015, %v2021
        %v2023 = vmul.f32 %v2022, %v2022
        %v2024 = vsel %vm749, %v2023, 0.0
        %2025 = vadd.xlane.f32.xlu0 %v2024
        %v2026 = vpop.xlane.xlu0 %2025
        %v2027 = vmul.f32 %v2026, %v759
        %v2028 = vadd.f32 %v2027, 1e-05
        %v2029 = vrsqrt.pop %v2028
        %v2030 = vmul.f32 %v2029, %v2028
        %v2031 = vmul.f32 %v2030, %v2029
        %v2032 = vmul.f32 0.5, %v2031
        %v2033 = vsub.f32 1.5, %v2032
        %v2034 = vmul.f32 %v2029, %v2033
        %vm2035 = vweird.f32 %v2028
        %vm2036 = vweird.f32 %v2029
        %vm2037 = vmor %vm2035, %vm2036
        %v2038 = vsel %vm2037, %v2029, %v2034
        %v2039 = vmul.f32 %v2022, %v2038
        %v2041 = vperm.slane %v2016, 0
        %v2043 = vmul.f32 %v2039, %v2041
        %v2045 = vperm.slane %v2017, 0
        %v2047 = vadd.f32 %v2043, %v2045
        %v2048 = vld [vmem:[#allocation11] sm:$0xff]
        %v2049 = vld [vmem:[#allocation11 + $0x8] sm:$0xff]
        %v2050 = vld [vmem:[#allocation11 + $0x10] sm:$0xff]
        %v2051 = vld [vmem:[#allocation11 + $0x18] sm:$0xff]
        %v2052 = vld [vmem:[#allocation11 + $0x20] sm:$0xff]
        %v2053 = vld [vmem:[#allocation11 + $0x28] sm:$0xff]
        %v2054 = vld [vmem:[#allocation11 + $0x30] sm:$0xff]
        %v2055 = vld [vmem:[#allocation11 + $0x38] sm:$0xff]
        %v2056 = vld [vmem:[%s12] sm:$0x1]
        %v2058 = vperm.slane %v2056, 0
        %v2061 = vsel %vm629, %v2047, 0
        %2063 = vmatpush.msra.mxu0 0.0
        %2064 = vmatpush.msra.mxu0 0.0
        %2065 = vmatpush.msra.mxu0 0.0
        %2066 = vmatpush.msra.mxu0 0.0
        %2067 = vmatpush.msra.mxu0 0.0
        %2068 = vmatpush.msra.mxu0 0.0
        %2069 = vmatpush.msra.mxu0 0.0
        %2070 = vmatpush.msra.mxu0 0.0
        %2071 = vmatpush.msra.mxu0 %v2055
        %2072 = vmatpush.msra.mxu0 %v2054
        %2073 = vmatpush.msra.mxu0 %v2053
        %2074 = vmatpush.msra.mxu0 %v2052
        %2075 = vmatpush.msra.mxu0 %v2051
        %2076 = vmatpush.msra.mxu0 %v2050
        %2077 = vmatpush.msra.mxu0 %v2049
        %2078 = vmatpush.msra.mxu0 %v2048
        %2079 = vmatmul.f32.gmra.mxu0 %v2061
        %v2080 = vpop.f32.mrf.mxu0
        %v2081 = vadd.f32 %v2058, %v2080
        %2082 = vdwg.mxu0
        %v2083 = vmul.f32 %v2081, 0.5
        %v2084 = vmul.f32 %v2081, 0.70710677
        %v2085 = vand.u32 2147483647, %v2084
        %v2086 = vmul.f32 %v2085, 0.3275911
        %v2087 = vadd.f32 %v2086, 1.0
        %v2088 = vrcp.pop %v2087
        %v2089 = vmul.f32 %v2087, %v2088
        %v2090 = vsub.f32 1.0, %v2089
        %v2091 = vmul.f32 %v2088, %v2090
        %v2092 = vadd.f32 %v2088, %v2091
        %vm2093 = vweird.f32 %v2087
        %vm2094 = vweird.f32 %v2088
        %vm2095 = vmor %vm2093, %vm2094
        %v2096 = vsel %vm2095, %v2088, %v2092
        %v2097 = vand.u32 2147483647, %v2087
        %vm2098 = vcmp.eq.f32.partialorder %v2097, 8.507059e+37
        %v2099 = vand.u32 %v2087, 2147483648
        %v2100 = vor.u32 1.1754944e-38, %v2099
        %v2101 = vsel %vm2098, %v2100, %v2096
        %v2102 = vmul.f32 1.0, %v2101
        %v2103 = vmul.f32 %v2102, 1.0614054
        %v2104 = vadd.f32 %v2103, -1.4531521
        %v2105 = vmul.f32 %v2104, %v2102
        %v2106 = vadd.f32 %v2105, 1.4214138
        %v2107 = vmul.f32 %v2106, %v2102
        %v2108 = vadd.f32 %v2107, -0.28449672
        %v2109 = vmul.f32 %v2108, %v2102
        %v2110 = vadd.f32 %v2109, 0.2548296
        %v2111 = vmul.f32 %v2110, %v2102
        %v2112 = vsub.f32 0.0, %v2085
        %v2113 = vmul.f32 %v2112, %v2085
        %v2114 = vmul.f32 %v2113, 1.442695
        %v2115 = vpow.pop %v2114
        %v2116 = vmul.f32 %v2111, %v2115
        %v2117 = vsub.f32 1.0, %v2116
        %vm2118 = vcmp.lt.f32.partialorder %v2084, 0.0
        %v2119 = vsub.f32 0.0, %v2117
        %v2120 = vsel %vm2118, %v2119, %v2117
        %v2121 = vadd.f32 %v2120, 1.0
        %v2122 = vmul.f32 %v2083, %v2121
        %v2123 = vld [vmem:[#allocation13] sm:$0xff]
        %v2124 = vld [vmem:[#allocation13 + $0x8] sm:$0xff]
        %v2125 = vld [vmem:[#allocation13 + $0x10] sm:$0xff]
        %v2126 = vld [vmem:[#allocation13 + $0x18] sm:$0xff]
        %v2127 = vld [vmem:[#allocation13 + $0x20] sm:$0xff]
        %v2128 = vld [vmem:[#allocation13 + $0x28] sm:$0xff]
        %v2129 = vld [vmem:[#allocation13 + $0x30] sm:$0xff]
        %v2130 = vld [vmem:[#allocation13 + $0x38] sm:$0xff]
        %v2131 = vld [vmem:[%s14] sm:$0x1]
        %v2133 = vperm.slane %v2131, 0
        %v2136 = vsel %vm629, %v2122, 0
        %2138 = vmatpush.msra.mxu0 0.0
        %2139 = vmatpush.msra.mxu0 0.0
        %2140 = vmatpush.msra.mxu0 0.0
        %2141 = vmatpush.msra.mxu0 0.0
        %2142 = vmatpush.msra.mxu0 0.0
        %2143 = vmatpush.msra.mxu0 0.0
        %2144 = vmatpush.msra.mxu0 0.0
        %2145 = vmatpush.msra.mxu0 0.0
        %2146 = vmatpush.msra.mxu0 %v2130
        %2147 = vmatpush.msra.mxu0 %v2129
        %2148 = vmatpush.msra.mxu0 %v2128
        %2149 = vmatpush.msra.mxu0 %v2127
        %2150 = vmatpush.msra.mxu0 %v2126
        %2151 = vmatpush.msra.mxu0 %v2125
        %2152 = vmatpush.msra.mxu0 %v2124
        %2153 = vmatpush.msra.mxu0 %v2123
        %2154 = vmatmul.f32.gmra.mxu0 %v2136
        %v2155 = vpop.f32.mrf.mxu0
        %v2156 = vadd.f32 %v2133, %v2155
        %2157 = vdwg.mxu0
        %v2158 = vadd.f32 %v2015, %v2156
        %2159 = vst.msk [vmem:[%s605] sm:$0xf] %vm749, %v2158
        %s2160 = sand.u32 %s363, 1
        %s2161 = scalar_lea.sflag [#allocation4], %s2160
        %s2162 = sand.u32 %s363, 1
        %s2163 = smul.addr %s2162, 4
        %s2164 = scalar_lea.vmem [#allocation14], %s2163
        // Predicated region
        $region109: #{tpu_custom_call.1} parent=79 // pred_check
          %p2165 = pneg %p373
        $region110: #{tpu_custom_call.1} parent=79 // pred_check_branch
          %2167 = sbr.rel (%p2165) target = $region112
        $region111: #{tpu_custom_call.1} parent=79 // pred_region
          %2169 = vsyncadd %s2161, 0
          %s2170 = smul.addr %s35, 4
          %s2171 = scalar_lea.hbm %s15, %s2170
          %s2173 = sshll.u32 %s2164, 4
          %s2174 = int_to_ptr.vmem [resolvable:$true] %s2173
          %s2175 = sshll.u32 %s2171, 4
          %s2176 = int_to_ptr.hbm [resolvable:$true] %s2175
          %2178 = dma.vmem_to_hbm [thread:$0]  %s2174, 64, %s2176, %s2161
        $region112: #{tpu_custom_call.1} parent=79 // pred_fallthru
          _
      $region80: #{tpu_custom_call.1} parent=5 // pred_fallthru
        _
      %p2179 = scmp.le.s32.totalorder 2, %s30
      // Predicated region
      $region113: #{tpu_custom_call.1} parent=5 // pred_check
        %p2180 = pneg %p2179
      $region114: #{tpu_custom_call.1} parent=5 // pred_check_branch
        %2182 = sbr.rel (%p2180) target = $region116
      $region115: #{tpu_custom_call.1} parent=5 // pred_region
        %s2183 = ssub.s32 %s30, 2
        // Predicated region
        $region117: #{tpu_custom_call.1} parent=115 // pred_check
          %p2184 = pneg %p379
        $region118: #{tpu_custom_call.1} parent=115 // pred_check_branch
          %2186 = sbr.rel (%p2184) target = $region120
        $region119: #{tpu_custom_call.1} parent=115 // pred_region
          %s2187 = sand.u32 %s364, 1
          %s2188 = scalar_lea.sflag [#allocation4], %s2187
          %s2189 = sand.u32 %s364, 1
          %s2190 = smul.addr %s2189, 4
          %s2191 = scalar_lea.vmem [#allocation14], %s2190
          %2193 = dma.done %s2188, 64
        $region120: #{tpu_custom_call.1} parent=115 // pred_fallthru
          _
      $region116: #{tpu_custom_call.1} parent=5 // pred_fallthru
        _
    $region6: #{tpu_custom_call.1} parent=1 // loop_footer
      %s34 = sadd.s32 1, %s30
    $region7: #{tpu_custom_call.1} parent=1 // loop_footer_branch
      %29 = sbr.rel target = $region3
    $region8: #{tpu_custom_call.1} parent=1 // loop_exit
      _
    %2194 = vsyncpa [#allocation3], 1
    %s2195 = scalar_lea.sflag [#allocation3], 1
    %2196 = vsyncpa %s2195, 1
    %2197 = vsyncpa [#allocation6], 1
    %2198 = vsyncpa [#allocation9], 1
    %2199 = vsyncpa [#allocation12], 1
    %2200 = vsyncpa [#allocation4], 1
    %s2201 = scalar_lea.sflag [#allocation4], 1
    %2202 = vsyncpa %s2201, 1

</llo_original>
